<compile_context>
chip_gen: v7x
topology: tpu7x:2x2x1
jax: 0.10.0
libtpu: 0.0.40
codegen_flags: <defaults>
</compile_context>

<pallas_src>
import functools

import jax
import jax.numpy as jnp
from jax.experimental import pallas as pl
from jax.experimental.pallas import tpu as pltpu

_ALIGN = 256  # full 256x256 MXU tiles on v6e/v7x; harmless padding on v5e.


def _round_up(x, m):
    return (x + m - 1) // m * m


def _cdiv(a, b):
    return (a + b - 1) // b


def _vmem_budget_bytes():
    """Per-TensorCore VMEM budget (leave ~1/4 headroom for the compiler)."""
    try:
        cap = int(pltpu.get_tpu_info().vmem_capacity_bytes)
    except Exception:
        cap = 64 * 1024 * 1024  # v7x-safe fallback (64 MiB / TensorCore)
    return min(cap * 3 // 4, 100 * 1024 * 1024)


def _vmem_estimate(tb, tn, k_p, h_p):
    """Rough VMEM footprint of the pipelined kernel (double-buffered blocks)."""
    return (2 * tb * k_p * 2             # x_emb input blocks (bf16)
            + 2 * k_p * h_p * 2          # H (grid-invariant, still 2-buffered)
            + 2 * (k_p + h_p) * tn * 2   # fused [W; U] column tiles (bf16)
            + 2 * tb * tn * 4            # f32 output tiles
            + tb * (k_p + h_p) * 2       # activation scratch (bf16)
            + 8 * (h_p + tn))            # d, b


def _nnlm_kernel(x_ref, h_ref, d_ref, wu_ref, b_ref, out_ref, act_ref, *, k_p):
    """One (batch-tile i, class-tile j) step: b + [x | tanh(d + x@H)] @ [W; U]."""
    j = pl.program_id(1)

    # NOTE: the act_ref cache is only valid because the class axis j is the
    # innermost, sequentially iterated ("arbitrary") grid axis: for every
    # batch tile i the j == 0 step runs first on the same core and refreshes
    # act_ref before any column tile reads it.  Do not reorder the grid axes
    # or mark j as "parallel".
    @pl.when(j == 0)
    def _():
        x = x_ref[...]                                       # (tb, K_p) bf16
        act_ref[:, :k_p] = x
        pre = d_ref[...] + jnp.dot(x, h_ref[...],
                                   preferred_element_type=jnp.float32)
        act_ref[:, k_p:] = jnp.tanh(pre).astype(act_ref.dtype)

    out = b_ref[...] + jnp.dot(act_ref[...], wu_ref[...],
                               preferred_element_type=jnp.float32)
    out_ref[...] = out.astype(out_ref.dtype)


def nnlm_prepare_params(C, H, W, U, d, b):
    """One-time padding / bf16 cast / W-U fusion of the NNLM parameters.

    Call once and reuse (or rely on jit caching): re-running this every step
    is a per-call XLA copy of the (potentially large) weights.
    """
    n_class, m = C.shape
    K, n_hidden = H.shape
    f32, bf16 = jnp.float32, jnp.bfloat16

    k_p = _round_up(K, _ALIGN)
    h_p = _round_up(n_hidden, _ALIGN)
    c_p = _round_up(n_class, _ALIGN)

    H_p = jnp.zeros((k_p, h_p), bf16).at[:K, :n_hidden].set(H.astype(bf16))
    # Fused weight: rows [0, K) hold W, rows [k_p, k_p + n_hidden) hold U.
    WU_p = (jnp.zeros((k_p + h_p, c_p), bf16)
            .at[:K, :n_class].set(W.astype(bf16))
            .at[k_p:k_p + n_hidden, :n_class].set(U.astype(bf16)))
    d_p = jnp.zeros((1, h_p), f32).at[0, :n_hidden].set(d.reshape(-1).astype(f32))
    b_p = jnp.zeros((1, c_p), f32).at[0, :n_class].set(b.reshape(-1).astype(f32))
    C_bf16 = C.astype(bf16)

    shapes = dict(m=m, n_class=n_class, n_hidden=n_hidden, K=K,
                  k_p=k_p, h_p=h_p, c_p=c_p)
    return (C_bf16, H_p, WU_p, d_p, b_p), shapes


def nnlm_forward(X, C, H, W, U, d, b, *, tb=512, tn=None):
    """NNLM forward. X: [B, n_step] int32 token ids. Returns [B, n_class] f32."""
    (C_bf16, H_p, WU_p, d_p, b_p), s = nnlm_prepare_params(C, H, W, U, d, b)
    B, n_step = X.shape
    K, k_p, h_p, c_p = s["K"], s["k_p"], s["h_p"], s["c_p"]
    n_class = s["n_class"]
    f32 = jnp.float32

    budget = _vmem_budget_bytes()

    # ---- batch tile: multiple of 16 (bf16 sublane packing), up to `tb` ----
    tb = _round_up(max(16, min(tb, _round_up(B, 16))), 16)
    # Keep >= 2 batch tiles when the batch allows it so the "parallel" batch
    # axis load-balances across both TensorCores of a v7x megacore.
    if B >= 64:
        tb = min(tb, _round_up(_cdiv(B, 2), 16))

    # ---- class tile: largest lane-dense tile that fits the VMEM budget ----
    if tn is None:
        tn = 128
        for cand in (1024, 512, 256, 128):
            if c_p % cand == 0 and _vmem_estimate(tb, cand, k_p, h_p) <= budget:
                tn = cand
                break
    assert tn % 128 == 0 and c_p % tn == 0

    # Shrink the batch tile if the working set still exceeds the VMEM budget.
    while tb > 64 and _vmem_estimate(tb, tn, k_p, h_p) > budget:
        tb = _round_up(tb // 2, 16)

    B_p = _round_up(B, tb)

    # ---- embedding gather (glue), emitted as bf16 in the padded-K layout ----
    # TODO(synk): fuse this gather into the kernel (scalar-prefetch the token
    # ids and gather rows of a VMEM-resident C on-chip) to remove the
    # B_p x K_p bf16 HBM round trip; kept in the wrapper because vocab-sized
    # VMEM gathers do not lower robustly on all Mosaic versions.
    X_p = jnp.zeros((B_p, n_step), X.dtype).at[:B].set(X)
    x_emb = jnp.take(C_bf16, X_p, axis=0).reshape(B_p, K)
    if k_p != K:
        x_emb = jnp.pad(x_emb, ((0, 0), (0, k_p - K)))

    grid = (B_p // tb, c_p // tn)
    kernel = functools.partial(_nnlm_kernel, k_p=k_p)

    out_p = pl.pallas_call(
        kernel,
        out_shape=jax.ShapeDtypeStruct((B_p, c_p), f32),
        grid_spec=pltpu.PrefetchScalarGridSpec(
            num_scalar_prefetch=0,
            grid=grid,
            in_specs=[
                pl.BlockSpec((tb, k_p), lambda i, j: (i, 0)),        # x_emb
                pl.BlockSpec((k_p, h_p), lambda i, j: (0, 0)),       # H
                pl.BlockSpec((1, h_p), lambda i, j: (0, 0)),         # d
                pl.BlockSpec((k_p + h_p, tn), lambda i, j: (0, j)),  # [W; U]
                pl.BlockSpec((1, tn), lambda i, j: (0, j)),          # b
            ],
            out_specs=pl.BlockSpec((tb, tn), lambda i, j: (i, j)),
            scratch_shapes=[pltpu.VMEM((tb, k_p + h_p), jnp.bfloat16)],
        ),
        compiler_params=pltpu.CompilerParams(
            dimension_semantics=("parallel", "arbitrary"),
            vmem_limit_bytes=budget,
        ),
    )(x_emb, H_p, d_p, WU_p, b_p)

    if B_p == B and c_p == n_class:
        return out_p
    return out_p[:B, :n_class]


def nnlm_reference(X, C, H, W, U, d, b):
    B, n_step = X.shape
    m = C.shape[1]
    x = jnp.take(C, X, axis=0).reshape(B, n_step * m)
    hidden = jnp.tanh(d + x @ H)
    return b + x @ W + hidden @ U


if __name__ == "__main__":
    # Small, module-consistent shapes; batch chosen so the batch grid axis has
    # two steps (tb -> 256 with the >=2-tile rule) to exercise the pipeline
    # and megacore sharding.
    m, n_class, n_step, n_hidden = 16, 32, 8, 32
    batch = 512

    key = jax.random.PRNGKey(0)
    kC, kH, kW, kd, kU, kb, kX = jax.random.split(key, 7)

    # Standard-normal init, matching torch.randn / nn.Embedding default N(0,1).
    C = jax.random.normal(kC, (n_class, m), dtype=jnp.float32)
    H = jax.random.normal(kH, (n_step * m, n_hidden), dtype=jnp.float32)
    W = jax.random.normal(kW, (n_step * m, n_class), dtype=jnp.float32)
    d = jax.random.normal(kd, (n_hidden,), dtype=jnp.float32)
    U = jax.random.normal(kU, (n_hidden, n_class), dtype=jnp.float32)
    b = jax.random.normal(kb, (n_class,), dtype=jnp.float32)

    X = jax.random.randint(kX, (batch, n_step), 0, n_class, dtype=jnp.int32)

    fwd = jax.jit(nnlm_forward)
    out = jax.block_until_ready(fwd(X, C, H, W, U, d, b))

    ref = nnlm_reference(X, C, H, W, U, d, b)
    assert out.shape == (batch, n_class)

    # bf16 matmul operands -> loosened tolerance vs the all-f32 reference.
    err = float(jnp.max(jnp.abs(out - ref)))
    scale = float(jnp.max(jnp.abs(ref)))
    assert err <= 2e-2 * scale + 1e-3, f"mismatch vs reference: err={err}, scale={scale}"

    print("KERNEL_OK")
</pallas_src>

<mosaic_0001>
module attributes {stable_mosaic.version = 11 : i64} {
  func.func @_nnlm_kernel(%arg0: i32, %arg1: i32, %arg2: memref<256x256xbf16, #tpu.memory_space<vmem>>, %arg3: memref<256x256xbf16, #tpu.memory_space<vmem>>, %arg4: memref<1x256xf32, #tpu.memory_space<vmem>>, %arg5: memref<512x256xbf16, #tpu.memory_space<vmem>>, %arg6: memref<1x256xf32, #tpu.memory_space<vmem>>, %arg7: memref<256x256xf32, #tpu.memory_space<vmem>>, %arg8: memref<256x512xbf16, #tpu.memory_space<vmem>>) attributes {dimension_semantics = [#tpu.dimension_semantics<parallel>, #tpu.dimension_semantics<arbitrary>], iteration_bounds = array<i64: 2, 1>, scalar_prefetch = 0 : i64, scratch_operands = 1 : i64, tpu.core_type = #tpu.core_type<tc>, window_params = [{transform_indices = @transform_0, window_bounds = array<i64: 256, 256>}, {pipeline_mode = #tpu.pipeline_mode<synchronous>, transform_indices = @transform_1, window_bounds = array<i64: 256, 256>}, {pipeline_mode = #tpu.pipeline_mode<synchronous>, transform_indices = @transform_2, window_bounds = array<i64: 1, 256>}, {transform_indices = @transform_3, window_bounds = array<i64: 512, 256>}, {transform_indices = @transform_4, window_bounds = array<i64: 1, 256>}, {transform_indices = @transform_5, window_bounds = array<i64: 256, 256>}]} {
    %c0_i32 = arith.constant 0 : i32
    %0 = arith.cmpi eq, %arg1, %c0_i32 : i32
    %1 = arith.extui %0 : i1 to i32
    %c0_i32_0 = arith.constant 0 : i32
    %2 = arith.cmpi ne, %1, %c0_i32_0 : i32
    scf.if %2 {
      %c0_8 = arith.constant 0 : index
      %c0_9 = arith.constant 0 : index
      %10 = vector.load %arg2[%c0_8, %c0_9] : memref<256x256xbf16, #tpu.memory_space<vmem>>, vector<256x256xbf16>
      %c0_10 = arith.constant 0 : index
      %c0_11 = arith.constant 0 : index
      %11 = vector.load %arg8[%c0_10, %c0_11] : memref<256x512xbf16, #tpu.memory_space<vmem>>, vector<256x256xbf16>
      tpu.vector_store %arg8[%c0_10, %c0_11], %10 {strides = array<i32>} : memref<256x512xbf16, #tpu.memory_space<vmem>>, vector<256x256xbf16>,
      %c0_12 = arith.constant 0 : index
      %c0_13 = arith.constant 0 : index
      %12 = vector.load %arg4[%c0_12, %c0_13] : memref<1x256xf32, #tpu.memory_space<vmem>>, vector<1x256xf32>
      %c0_14 = arith.constant 0 : index
      %c0_15 = arith.constant 0 : index
      %13 = vector.load %arg3[%c0_14, %c0_15] : memref<256x256xbf16, #tpu.memory_space<vmem>>, vector<256x256xbf16>
      %cst_16 = arith.constant dense<0.000000e+00> : vector<256x256xf32>
      %14 = tpu.matmul %10, %13, %cst_16 {dimension_numbers = #tpu.dot_dimension_numbers<[1], [0], [0], [1], [0, 0, 1, 1], [], []>} : vector<256x256xbf16>, vector<256x256xbf16>, vector<256x256xf32> -> vector<256x256xf32>
      %15 = vector.broadcast %12 : vector<1x256xf32> to vector<256x256xf32>
      %16 = arith.addf %15, %14 : vector<256x256xf32>
      %17 = math.tanh %16 : vector<256x256xf32>
      %18 = arith.truncf %17 : vector<256x256xf32> to vector<256x256xbf16>
      %c0_17 = arith.constant 0 : index
      %c256 = arith.constant 256 : index
      %19 = vector.load %arg8[%c0_17, %c256] : memref<256x512xbf16, #tpu.memory_space<vmem>>, vector<256x256xbf16>
      tpu.vector_store %arg8[%c0_17, %c256], %18 {strides = array<i32>} : memref<256x512xbf16, #tpu.memory_space<vmem>>, vector<256x256xbf16>,
    } else {
    }
    %c0 = arith.constant 0 : index
    %c0_1 = arith.constant 0 : index
    %3 = vector.load %arg6[%c0, %c0_1] : memref<1x256xf32, #tpu.memory_space<vmem>>, vector<1x256xf32>
    %c0_2 = arith.constant 0 : index
    %c0_3 = arith.constant 0 : index
    %4 = vector.load %arg8[%c0_2, %c0_3] : memref<256x512xbf16, #tpu.memory_space<vmem>>, vector<256x512xbf16>
    %c0_4 = arith.constant 0 : index
    %c0_5 = arith.constant 0 : index
    %5 = vector.load %arg5[%c0_4, %c0_5] : memref<512x256xbf16, #tpu.memory_space<vmem>>, vector<512x256xbf16>
    %cst = arith.constant dense<0.000000e+00> : vector<256x256xf32>
    %6 = tpu.matmul %4, %5, %cst {dimension_numbers = #tpu.dot_dimension_numbers<[1], [0], [0], [1], [0, 0, 1, 1], [], []>} : vector<256x512xbf16>, vector<512x256xbf16>, vector<256x256xf32> -> vector<256x256xf32>
    %7 = vector.broadcast %3 : vector<1x256xf32> to vector<256x256xf32>
    %8 = arith.addf %7, %6 : vector<256x256xf32>
    %c0_6 = arith.constant 0 : index
    %c0_7 = arith.constant 0 : index
    %9 = vector.load %arg7[%c0_6, %c0_7] : memref<256x256xf32, #tpu.memory_space<vmem>>, vector<256x256xf32>
    tpu.vector_store %arg7[%c0_6, %c0_7], %8 {strides = array<i32>} : memref<256x256xf32, #tpu.memory_space<vmem>>, vector<256x256xf32>,
    return
  }
  func.func @transform_0(%arg0: i32, %arg1: i32) -> (i32, i32) {
    %c0_i32 = arith.constant 0 : i32
    %c0_i32_0 = arith.constant 0 : i32
    return %arg0, %c0_i32 : i32, i32
  }
  func.func @transform_1(%arg0: i32, %arg1: i32) -> (i32, i32) {
    %c0_i32 = arith.constant 0 : i32
    %c0_i32_0 = arith.constant 0 : i32
    %c0_i32_1 = arith.constant 0 : i32
    return %c0_i32, %c0_i32_0 : i32, i32
  }
  func.func @transform_2(%arg0: i32, %arg1: i32) -> (i32, i32) {
    %c0_i32 = arith.constant 0 : i32
    %c0_i32_0 = arith.constant 0 : i32
    %c0_i32_1 = arith.constant 0 : i32
    return %c0_i32, %c0_i32_0 : i32, i32
  }
  func.func @transform_3(%arg0: i32, %arg1: i32) -> (i32, i32) {
    %c0_i32 = arith.constant 0 : i32
    %c0_i32_0 = arith.constant 0 : i32
    return %c0_i32, %arg1 : i32, i32
  }
  func.func @transform_4(%arg0: i32, %arg1: i32) -> (i32, i32) {
    %c0_i32 = arith.constant 0 : i32
    %c0_i32_0 = arith.constant 0 : i32
    return %c0_i32, %arg1 : i32, i32
  }
  func.func @transform_5(%arg0: i32, %arg1: i32) -> (i32, i32) {
    %c0_i32 = arith.constant 0 : i32
    return %arg0, %arg1 : i32, i32
  }
}

</mosaic_0001>

<llo_original>
// kernel: nnlm_forward.1
$region0: #{nnlm_forward.1}
  #allocation0 [shape = 'u32[]', space=smem, size = 0x4, offset = 0x4, fixed_abs, tag = 'smem constant byte address 0x4 - core index']
  #allocation1 [shape = 'u32[144,128]{1,0:T(1,128)}', space=vmem, size = 0x12000, scoped, tag = 'internal scratch']
  #allocation2 [shape = 'bf16[256,512]{1,0:T(16,128)(2,1)}', space=vmem, size = 0x40000, scoped, tag = 'scratch operand']
  %s0 = inlined_call_operand.vmem [shape: bf16[512,256], index: 0, kind: input, shape index: {}]
  %s1 = inlined_call_operand.vmem [shape: bf16[256,256], index: 1, kind: input, shape index: {}]
  %s2 = inlined_call_operand.vmem [shape: f32[1,256], index: 2, kind: input, shape index: {}]
  %s3 = inlined_call_operand.vmem [shape: bf16[512,256], index: 3, kind: input, shape index: {}]
  %s4 = inlined_call_operand.vmem [shape: f32[1,256], index: 4, kind: input, shape index: {}]
  %s5 = inlined_call_operand.vmem [shape: f32[512,256], index: 5, kind: output, shape index: {}]
  %s6 = sld [smem:[#allocation0]]
  $region57: #{nnlm_forward.1} parent=0
    _
  %s8 = ssub.s32 1, %s6
  %s9 = scalar_select 0, %s8, %s6
  loop: start=0, step=1, limit=4
  $region2: #{nnlm_forward.1} parent=0 // loop_pre_header
    _
  $region3: #{nnlm_forward.1} parent=0 // loop_header
    %s11 = sphi 0, %s15
    %p12 = scmp.ge.s32.totalorder %s11, 4
    %s18 = sphi 0, %s30
    %s19 = sphi 0, %s26
    %s20 = sphi 0, %s18
    %s21 = sphi 0, %s19
    %s22 = sphi 0, %s20
    %s23 = sphi 0, %s21
    %s33 = sphi 0, %s35
    %s36 = sphi 0, %s33
    %s37 = sphi 0, %s36
    %s53 = sphi 0, %s37
    %s57 = sphi 0, %s57
    %s59 = sphi 0, %s57
    %s60 = sphi 0, %s59
    %s74 = sphi 0, %s60
    %s78 = sphi 0, %s78
    %s80 = sphi 0, %s78
    %s81 = sphi 0, %s80
    %s95 = sphi 0, %s81
    %s101 = sphi 0, %s103
    %s104 = sphi 0, %s101
    %s105 = sphi 0, %s104
    %s121 = sphi 0, %s105
    %s127 = sphi 0, %s129
    %s130 = sphi 0, %s127
    %s131 = sphi 0, %s130
    %s147 = sphi 0, %s131
    %s155 = sphi 0, %s157
    %s158 = sphi 0, %s155
    %s159 = sphi 0, %s158
    %s175 = sphi 0, %s159
  $region4: #{nnlm_forward.1} parent=0 // loop_header_branch
    %14 = sbr.rel (%p12) target = $region8
  $region5: #{nnlm_forward.1} parent=0 // loop_body
    %s16 = ssub.s32 %s11, 1
    %s17 = ssub.s32 %s11, 2
    %s24 = sadd.s32 1, %s19
    %p25 = scmp.ge.s32.totalorder %s24, 1
    %s26 = scalar_select %p25, 0, %s24
    %s27 = sadd.s32 1, %s18
    %s28 = scalar_select %p25, %s27, %s18
    %p29 = scmp.ge.s32.totalorder %s28, 2
    %s30 = scalar_select %p29, 0, %s28
    %s31 = ssub.s32 %s18, %s30
    %p32 = scmp.eq.s32.totalorder %s31, 0
    %s34 = sadd.s32 %s33, 1
    %s35 = scalar_select %p32, %s33, %s34
    %p38 = pneg %p32
    %p39 = scmp.eq.s32.totalorder %s11, 1
    %p40 = por %p38, %p39
    %p41 = scmp.ne.s32.totalorder %s33, %s36
    %p42 = scmp.eq.s32.totalorder %s11, 0
    %p43 = por %p41, %p42
    %p44 = scmp.ne.s32.totalorder %s33, %s36
    %p45 = scmp.eq.s32.totalorder %s16, 1
    %p46 = por %p44, %p45
    %p47 = scmp.ne.s32.totalorder %s36, %s37
    %p48 = scmp.eq.s32.totalorder %s16, 0
    %p49 = por %p47, %p48
    %p50 = scmp.ne.s32.totalorder %s36, %s37
    %p51 = scmp.eq.s32.totalorder %s17, 1
    %p52 = por %p50, %p51
    %p54 = scmp.ne.s32.totalorder %s37, %s53
    %p55 = scmp.eq.s32.totalorder %s17, 0
    %p56 = por %p54, %p55
    %s58 = sadd.s32 %s57, 1
    %p61 = scmp.eq.s32.totalorder %s11, 1
    %p62 = scmp.ne.s32.totalorder %s57, %s59
    %p63 = scmp.eq.s32.totalorder %s11, 0
    %p64 = por %p62, %p63
    %p65 = scmp.ne.s32.totalorder %s57, %s59
    %p66 = scmp.eq.s32.totalorder %s16, 1
    %p67 = por %p65, %p66
    %p68 = scmp.ne.s32.totalorder %s59, %s60
    %p69 = scmp.eq.s32.totalorder %s16, 0
    %p70 = por %p68, %p69
    %p71 = scmp.ne.s32.totalorder %s59, %s60
    %p72 = scmp.eq.s32.totalorder %s17, 1
    %p73 = por %p71, %p72
    %p75 = scmp.ne.s32.totalorder %s60, %s74
    %p76 = scmp.eq.s32.totalorder %s17, 0
    %p77 = por %p75, %p76
    %s79 = sadd.s32 %s78, 1
    %p82 = scmp.eq.s32.totalorder %s11, 1
    %p83 = scmp.ne.s32.totalorder %s78, %s80
    %p84 = scmp.eq.s32.totalorder %s11, 0
    %p85 = por %p83, %p84
    %p86 = scmp.ne.s32.totalorder %s78, %s80
    %p87 = scmp.eq.s32.totalorder %s16, 1
    %p88 = por %p86, %p87
    %p89 = scmp.ne.s32.totalorder %s80, %s81
    %p90 = scmp.eq.s32.totalorder %s16, 0
    %p91 = por %p89, %p90
    %p92 = scmp.ne.s32.totalorder %s80, %s81
    %p93 = scmp.eq.s32.totalorder %s17, 1
    %p94 = por %p92, %p93
    %p96 = scmp.ne.s32.totalorder %s81, %s95
    %p97 = scmp.eq.s32.totalorder %s17, 0
    %p98 = por %p96, %p97
    %s99 = ssub.s32 %s19, %s26
    %p100 = scmp.eq.s32.totalorder %s99, 0
    %s102 = sadd.s32 %s101, 1
    %s103 = scalar_select %p100, %s101, %s102
    %p106 = pneg %p100
    %p107 = scmp.eq.s32.totalorder %s11, 1
    %p108 = por %p106, %p107
    %p109 = scmp.ne.s32.totalorder %s101, %s104
    %p110 = scmp.eq.s32.totalorder %s11, 0
    %p111 = por %p109, %p110
    %p112 = scmp.ne.s32.totalorder %s101, %s104
    %p113 = scmp.eq.s32.totalorder %s16, 1
    %p114 = por %p112, %p113
    %p115 = scmp.ne.s32.totalorder %s104, %s105
    %p116 = scmp.eq.s32.totalorder %s16, 0
    %p117 = por %p115, %p116
    %p118 = scmp.ne.s32.totalorder %s104, %s105
    %p119 = scmp.eq.s32.totalorder %s17, 1
    %p120 = por %p118, %p119
    %p122 = scmp.ne.s32.totalorder %s105, %s121
    %p123 = scmp.eq.s32.totalorder %s17, 0
    %p124 = por %p122, %p123
    %s125 = ssub.s32 %s19, %s26
    %p126 = scmp.eq.s32.totalorder %s125, 0
    %s128 = sadd.s32 %s127, 1
    %s129 = scalar_select %p126, %s127, %s128
    %p132 = pneg %p126
    %p133 = scmp.eq.s32.totalorder %s11, 1
    %p134 = por %p132, %p133
    %p135 = scmp.ne.s32.totalorder %s127, %s130
    %p136 = scmp.eq.s32.totalorder %s11, 0
    %p137 = por %p135, %p136
    %p138 = scmp.ne.s32.totalorder %s127, %s130
    %p139 = scmp.eq.s32.totalorder %s16, 1
    %p140 = por %p138, %p139
    %p141 = scmp.ne.s32.totalorder %s130, %s131
    %p142 = scmp.eq.s32.totalorder %s16, 0
    %p143 = por %p141, %p142
    %p144 = scmp.ne.s32.totalorder %s130, %s131
    %p145 = scmp.eq.s32.totalorder %s17, 1
    %p146 = por %p144, %p145
    %p148 = scmp.ne.s32.totalorder %s131, %s147
    %p149 = scmp.eq.s32.totalorder %s17, 0
    %p150 = por %p148, %p149
    %s151 = ssub.s32 %s18, %s30
    %s152 = ssub.s32 %s19, %s26
    %s153 = sor.u32 %s151, %s152
    %p154 = scmp.eq.s32.totalorder %s153, 0
    %s156 = sadd.s32 %s155, 1
    %s157 = scalar_select %p154, %s155, %s156
    %p160 = pneg %p154
    %p161 = scmp.eq.s32.totalorder %s11, 1
    %p162 = por %p160, %p161
    %p163 = scmp.ne.s32.totalorder %s155, %s158
    %p164 = scmp.eq.s32.totalorder %s11, 0
    %p165 = por %p163, %p164
    %p166 = scmp.ne.s32.totalorder %s155, %s158
    %p167 = scmp.eq.s32.totalorder %s16, 1
    %p168 = por %p166, %p167
    %p169 = scmp.ne.s32.totalorder %s158, %s159
    %p170 = scmp.eq.s32.totalorder %s16, 0
    %p171 = por %p169, %p170
    %p172 = scmp.ne.s32.totalorder %s158, %s159
    %p173 = scmp.eq.s32.totalorder %s17, 1
    %p174 = por %p172, %p173
    %p176 = scmp.ne.s32.totalorder %s159, %s175
    %p177 = scmp.eq.s32.totalorder %s17, 0
    %p178 = por %p176, %p177
    %p179 = scmp.le.s32.totalorder 1, %s11
    %p180 = scmp.lt.s32.totalorder %s11, 3
    %p181 = pnand %p179, %p180
    %p182 = pneg %p181
    // Predicated region
    $region9: #{nnlm_forward.1} parent=5 // pred_check
      _
    $region10: #{nnlm_forward.1} parent=5 // pred_check_branch
      %184 = sbr.rel (%p181) target = $region12
    $region11: #{nnlm_forward.1} parent=5 // pred_region
      %s185 = ssub.s32 %s11, 1
      // Predicated region
      $region13: #{nnlm_forward.1} parent=11 // pred_check
        %p186 = pneg %p70
      $region14: #{nnlm_forward.1} parent=11 // pred_check_branch
        %188 = sbr.rel (%p186) target = $region16
      $region15: #{nnlm_forward.1} parent=11 // pred_region
        _
      $region16: #{nnlm_forward.1} parent=11 // pred_fallthru
        _
      // Predicated region
      $region17: #{nnlm_forward.1} parent=11 // pred_check
        %p189 = pneg %p91
      $region18: #{nnlm_forward.1} parent=11 // pred_check_branch
        %191 = sbr.rel (%p189) target = $region20
      $region19: #{nnlm_forward.1} parent=11 // pred_region
        _
      $region20: #{nnlm_forward.1} parent=11 // pred_fallthru
        _
      // Predicated region
      $region21: #{nnlm_forward.1} parent=11 // pred_check
        %p192 = pneg %p117
      $region22: #{nnlm_forward.1} parent=11 // pred_check_branch
        %194 = sbr.rel (%p192) target = $region24
      $region23: #{nnlm_forward.1} parent=11 // pred_region
        %s195 = smul.u32 2, %s21
        %p196 = scmp.lt.s32.totalorder %s195, 1
        %s197 = scalar_select %p196, %s195, 1
        %s198 = smul.addr %s197, 4
        %s199 = scalar_lea.vmem %s3, %s198
        %s200 = smul.u32 2, %s21
      $region24: #{nnlm_forward.1} parent=11 // pred_fallthru
        _
      // Predicated region
      $region25: #{nnlm_forward.1} parent=11 // pred_check
        %p201 = pneg %p143
      $region26: #{nnlm_forward.1} parent=11 // pred_check_branch
        %203 = sbr.rel (%p201) target = $region28
      $region27: #{nnlm_forward.1} parent=11 // pred_region
        %s204 = smul.u32 2, %s21
        %p205 = scmp.lt.s32.totalorder %s204, 1
        %s206 = scalar_select %p205, %s204, 1
        %s207 = scalar_lea.vmem %s4, %s206
        %s208 = smul.u32 2, %s21
      $region28: #{nnlm_forward.1} parent=11 // pred_fallthru
        _
    $region12: #{nnlm_forward.1} parent=5 // pred_fallthru
      _
    %p209 = scmp.lt.s32.totalorder %s11, 2
    // Predicated region
    $region29: #{nnlm_forward.1} parent=5 // pred_check
      %p210 = pneg %p209
    $region30: #{nnlm_forward.1} parent=5 // pred_check_branch
      %212 = sbr.rel (%p210) target = $region32
    $region31: #{nnlm_forward.1} parent=5 // pred_region
      // Predicated region
      $region33: #{nnlm_forward.1} parent=31 // pred_check
        %p213 = pneg %p43
      $region34: #{nnlm_forward.1} parent=31 // pred_check_branch
        %215 = sbr.rel (%p213) target = $region36
      $region35: #{nnlm_forward.1} parent=31 // pred_region
        %s216 = smul.u32 32, %s18
        %p217 = scmp.lt.s32.totalorder %s216, 63
        %s218 = scalar_select %p217, %s216, 63
        %s219 = smul.addr %s218, 2
        %s220 = smul.addr %s219, 4
        %s221 = scalar_lea.vmem %s0, %s220
        %s222 = smul.u32 32, %s18
      $region36: #{nnlm_forward.1} parent=31 // pred_fallthru
        _
    $region32: #{nnlm_forward.1} parent=5 // pred_fallthru
      _
    %p223 = scmp.le.s32.totalorder 1, %s11
    %p224 = scmp.lt.s32.totalorder %s11, 3
    %p225 = pnand %p223, %p224
    %p226 = pneg %p225
    // Predicated region
    $region37: #{nnlm_forward.1} parent=5 // pred_check
      _
    $region38: #{nnlm_forward.1} parent=5 // pred_check_branch
      %228 = sbr.rel (%p225) target = $region40
    $region39: #{nnlm_forward.1} parent=5 // pred_region
      %s229 = ssub.s32 %s11, 1
      %s230 = smul.u32 32, %s20
      %p231 = scmp.lt.s32.totalorder %s230, 63
      %s232 = scalar_select %p231, %s230, 63
      %s233 = smul.addr %s232, 2
      %s234 = smul.addr %s233, 4
      %s235 = scalar_lea.vmem %s0, %s234
      %p236 = pneg %p49
      %p237 = pneg %p46
      %p238 = pneg %p70
      %p239 = pneg %p67
      %p240 = pneg %p91
      %p241 = pneg %p88
      %s242 = smul.u32 2, %s21
      %p243 = scmp.lt.s32.totalorder %s242, 1
      %s244 = scalar_select %p243, %s242, 1
      %s245 = smul.addr %s244, 4
      %s246 = scalar_lea.vmem %s3, %s245
      %p247 = pneg %p117
      %p248 = pneg %p114
      %s249 = smul.u32 2, %s21
      %p250 = scmp.lt.s32.totalorder %s249, 1
      %s251 = scalar_select %p250, %s249, 1
      %s252 = scalar_lea.vmem %s4, %s251
      %p253 = pneg %p143
      %p254 = pneg %p140
      %p255 = pneg %p171
      %p256 = pneg %p168
      %s257 = smul.u32 32, %s20
      %s258 = smul.u32 2, %s21
      %p259 = scmp.lt.s32.totalorder %s257, 63
      %s260 = scalar_select %p259, %s257, 63
      %p261 = scmp.lt.s32.totalorder %s258, 1
      %s262 = scalar_select %p261, %s258, 1
      %s263 = smul.addr %s260, 2
      %s264 = sadd.s32 %s262, %s263
      %s265 = smul.addr %s264, 8
      %s266 = scalar_lea.vmem %s5, %s265
      %s267 = smul.u32 32, %s20
      %p268 = scmp.lt.s32.totalorder %s267, 63
      %s269 = scalar_select %p268, %s267, 63
      %s270 = smul.addr %s269, 2
      %s271 = smul.addr %s270, 4
      %s272 = scalar_lea.vmem %s0, %s271
      %s273 = smul.u32 32, %s20
      %s274 = smul.u32 2, %s21
      %p275 = scmp.lt.s32.totalorder %s274, 1
      %s276 = scalar_select %p275, %s274, 1
      %s277 = smul.addr %s276, 4
      %s278 = scalar_lea.vmem %s3, %s277
      %s279 = smul.u32 2, %s21
      %s280 = smul.u32 2, %s21
      %p281 = scmp.lt.s32.totalorder %s280, 1
      %s282 = scalar_select %p281, %s280, 1
      %s283 = scalar_lea.vmem %s4, %s282
      %s284 = smul.u32 2, %s21
      %s285 = smul.u32 32, %s20
      %s286 = smul.u32 2, %s21
      %p287 = scmp.lt.s32.totalorder %s285, 63
      %s288 = scalar_select %p287, %s285, 63
      %p289 = scmp.lt.s32.totalorder %s286, 1
      %s290 = scalar_select %p289, %s286, 1
      %s291 = smul.addr %s288, 2
      %s292 = sadd.s32 %s290, %s291
      %s293 = smul.addr %s292, 8
      %s294 = scalar_lea.vmem %s5, %s293
      %s295 = smul.u32 32, %s20
      %s296 = smul.u32 2, %s21
      %p297 = scmp.eq.s32.totalorder %s21, 0
      // Predicated region
      $region41: #{nnlm_forward.1} parent=39 // pred_check
        %p298 = pneg %p297
      $region42: #{nnlm_forward.1} parent=39 // pred_check_branch
        %300 = sbr.rel (%p298) target = $region44
      $region43: #{nnlm_forward.1} parent=39 // pred_region
        %v301 = vld [vmem:[%s272] sm:$0xff]
        %v302 = vld [vmem:[%s272 + $0x8] sm:$0xff]
        %v303 = vld [vmem:[%s272 + $0x10] sm:$0xff]
        %v304 = vld [vmem:[%s272 + $0x18] sm:$0xff]
        %v305 = vld [vmem:[%s272 + $0x20] sm:$0xff]
        %v306 = vld [vmem:[%s272 + $0x28] sm:$0xff]
        %v307 = vld [vmem:[%s272 + $0x30] sm:$0xff]
        %v308 = vld [vmem:[%s272 + $0x38] sm:$0xff]
        %v309 = vld [vmem:[%s272 + $0x40] sm:$0xff]
        %v310 = vld [vmem:[%s272 + $0x48] sm:$0xff]
        %v311 = vld [vmem:[%s272 + $0x50] sm:$0xff]
        %v312 = vld [vmem:[%s272 + $0x58] sm:$0xff]
        %v313 = vld [vmem:[%s272 + $0x60] sm:$0xff]
        %v314 = vld [vmem:[%s272 + $0x68] sm:$0xff]
        %v315 = vld [vmem:[%s272 + $0x70] sm:$0xff]
        %v316 = vld [vmem:[%s272 + $0x78] sm:$0xff]
        %v317 = vld [vmem:[%s272 + $0x80] sm:$0xff]
        %v318 = vld [vmem:[%s272 + $0x88] sm:$0xff]
        %v319 = vld [vmem:[%s272 + $0x90] sm:$0xff]
        %v320 = vld [vmem:[%s272 + $0x98] sm:$0xff]
        %v321 = vld [vmem:[%s272 + $0xa0] sm:$0xff]
        %v322 = vld [vmem:[%s272 + $0xa8] sm:$0xff]
        %v323 = vld [vmem:[%s272 + $0xb0] sm:$0xff]
        %v324 = vld [vmem:[%s272 + $0xb8] sm:$0xff]
        %v325 = vld [vmem:[%s272 + $0xc0] sm:$0xff]
        %v326 = vld [vmem:[%s272 + $0xc8] sm:$0xff]
        %v327 = vld [vmem:[%s272 + $0xd0] sm:$0xff]
        %v328 = vld [vmem:[%s272 + $0xd8] sm:$0xff]
        %v329 = vld [vmem:[%s272 + $0xe0] sm:$0xff]
        %v330 = vld [vmem:[%s272 + $0xe8] sm:$0xff]
        %v331 = vld [vmem:[%s272 + $0xf0] sm:$0xff]
        %v332 = vld [vmem:[%s272 + $0xf8] sm:$0xff]
        %v365 = vunpack.c.l.b16 %v301
        %v366 = vunpack.c.h.b16 %v301
        %v367 = vunpack.c.l.b16 %v302
        %v368 = vunpack.c.h.b16 %v302
        %v369 = vunpack.c.l.b16 %v303
        %v370 = vunpack.c.h.b16 %v303
        %v371 = vunpack.c.l.b16 %v304
        %v372 = vunpack.c.h.b16 %v304
        %v373 = vunpack.c.l.b16 %v305
        %v374 = vunpack.c.h.b16 %v305
        %v375 = vunpack.c.l.b16 %v306
        %v376 = vunpack.c.h.b16 %v306
        %v377 = vunpack.c.l.b16 %v307
        %v378 = vunpack.c.h.b16 %v307
        %v379 = vunpack.c.l.b16 %v308
        %v380 = vunpack.c.h.b16 %v308
        %v381 = vunpack.c.l.b16 %v309
        %v382 = vunpack.c.h.b16 %v309
        %v383 = vunpack.c.l.b16 %v310
        %v384 = vunpack.c.h.b16 %v310
        %v385 = vunpack.c.l.b16 %v311
        %v386 = vunpack.c.h.b16 %v311
        %v387 = vunpack.c.l.b16 %v312
        %v388 = vunpack.c.h.b16 %v312
        %v389 = vunpack.c.l.b16 %v313
        %v390 = vunpack.c.h.b16 %v313
        %v391 = vunpack.c.l.b16 %v314
        %v392 = vunpack.c.h.b16 %v314
        %v393 = vunpack.c.l.b16 %v315
        %v394 = vunpack.c.h.b16 %v315
        %v395 = vunpack.c.l.b16 %v316
        %v396 = vunpack.c.h.b16 %v316
        %v397 = vunpack.c.l.b16 %v317
        %v398 = vunpack.c.h.b16 %v317
        %v399 = vunpack.c.l.b16 %v318
        %v400 = vunpack.c.h.b16 %v318
        %v401 = vunpack.c.l.b16 %v319
        %v402 = vunpack.c.h.b16 %v319
        %v403 = vunpack.c.l.b16 %v320
        %v404 = vunpack.c.h.b16 %v320
        %v405 = vunpack.c.l.b16 %v321
        %v406 = vunpack.c.h.b16 %v321
        %v407 = vunpack.c.l.b16 %v322
        %v408 = vunpack.c.h.b16 %v322
        %v409 = vunpack.c.l.b16 %v323
        %v410 = vunpack.c.h.b16 %v323
        %v411 = vunpack.c.l.b16 %v324
        %v412 = vunpack.c.h.b16 %v324
        %v413 = vunpack.c.l.b16 %v325
        %v414 = vunpack.c.h.b16 %v325
        %v415 = vunpack.c.l.b16 %v326
        %v416 = vunpack.c.h.b16 %v326
        %v417 = vunpack.c.l.b16 %v327
        %v418 = vunpack.c.h.b16 %v327
        %v419 = vunpack.c.l.b16 %v328
        %v420 = vunpack.c.h.b16 %v328
        %v421 = vunpack.c.l.b16 %v329
        %v422 = vunpack.c.h.b16 %v329
        %v423 = vunpack.c.l.b16 %v330
        %v424 = vunpack.c.h.b16 %v330
        %v425 = vunpack.c.l.b16 %v331
        %v426 = vunpack.c.h.b16 %v331
        %v427 = vunpack.c.l.b16 %v332
        %v428 = vunpack.c.h.b16 %v332
        %v429 = vpack.c.b16 %v367, %v365
        %v430 = vpack.c.b16 %v368, %v366
        %v431 = vpack.c.b16 %v371, %v369
        %v432 = vpack.c.b16 %v372, %v370
        %v433 = vpack.c.b16 %v375, %v373
        %v434 = vpack.c.b16 %v376, %v374
        %v435 = vpack.c.b16 %v379, %v377
        %v436 = vpack.c.b16 %v380, %v378
        %v437 = vpack.c.b16 %v383, %v381
        %v438 = vpack.c.b16 %v384, %v382
        %v439 = vpack.c.b16 %v387, %v385
        %v440 = vpack.c.b16 %v388, %v386
        %v441 = vpack.c.b16 %v391, %v389
        %v442 = vpack.c.b16 %v392, %v390
        %v443 = vpack.c.b16 %v395, %v393
        %v444 = vpack.c.b16 %v396, %v394
        %v445 = vpack.c.b16 %v399, %v397
        %v446 = vpack.c.b16 %v400, %v398
        %v447 = vpack.c.b16 %v403, %v401
        %v448 = vpack.c.b16 %v404, %v402
        %v449 = vpack.c.b16 %v407, %v405
        %v450 = vpack.c.b16 %v408, %v406
        %v451 = vpack.c.b16 %v411, %v409
        %v452 = vpack.c.b16 %v412, %v410
        %v453 = vpack.c.b16 %v415, %v413
        %v454 = vpack.c.b16 %v416, %v414
        %v455 = vpack.c.b16 %v419, %v417
        %v456 = vpack.c.b16 %v420, %v418
        %v457 = vpack.c.b16 %v423, %v421
        %v458 = vpack.c.b16 %v424, %v422
        %v459 = vpack.c.b16 %v427, %v425
        %v460 = vpack.c.b16 %v428, %v426
        %493 = vst [vmem:[#allocation2] sm:$0xff] %v429
        %494 = vst [vmem:[#allocation2 + $0x8] sm:$0xff] %v430
        %495 = vst [vmem:[#allocation2 + $0x20] sm:$0xff] %v431
        %496 = vst [vmem:[#allocation2 + $0x28] sm:$0xff] %v432
        %497 = vst [vmem:[#allocation2 + $0x40] sm:$0xff] %v433
        %498 = vst [vmem:[#allocation2 + $0x48] sm:$0xff] %v434
        %499 = vst [vmem:[#allocation2 + $0x60] sm:$0xff] %v435
        %500 = vst [vmem:[#allocation2 + $0x68] sm:$0xff] %v436
        %501 = vst [vmem:[#allocation2 + $0x80] sm:$0xff] %v437
        %502 = vst [vmem:[#allocation2 + $0x88] sm:$0xff] %v438
        %503 = vst [vmem:[#allocation2 + $0xa0] sm:$0xff] %v439
        %504 = vst [vmem:[#allocation2 + $0xa8] sm:$0xff] %v440
        %505 = vst [vmem:[#allocation2 + $0xc0] sm:$0xff] %v441
        %506 = vst [vmem:[#allocation2 + $0xc8] sm:$0xff] %v442
        %507 = vst [vmem:[#allocation2 + $0xe0] sm:$0xff] %v443
        %508 = vst [vmem:[#allocation2 + $0xe8] sm:$0xff] %v444
        %509 = vst [vmem:[#allocation2 + $0x100] sm:$0xff] %v445
        %510 = vst [vmem:[#allocation2 + $0x108] sm:$0xff] %v446
        %511 = vst [vmem:[#allocation2 + $0x120] sm:$0xff] %v447
        %512 = vst [vmem:[#allocation2 + $0x128] sm:$0xff] %v448
        %513 = vst [vmem:[#allocation2 + $0x140] sm:$0xff] %v449
        %514 = vst [vmem:[#allocation2 + $0x148] sm:$0xff] %v450
        %515 = vst [vmem:[#allocation2 + $0x160] sm:$0xff] %v451
        %516 = vst [vmem:[#allocation2 + $0x168] sm:$0xff] %v452
        %517 = vst [vmem:[#allocation2 + $0x180] sm:$0xff] %v453
        %518 = vst [vmem:[#allocation2 + $0x188] sm:$0xff] %v454
        %519 = vst [vmem:[#allocation2 + $0x1a0] sm:$0xff] %v455
        %520 = vst [vmem:[#allocation2 + $0x1a8] sm:$0xff] %v456
        %521 = vst [vmem:[#allocation2 + $0x1c0] sm:$0xff] %v457
        %522 = vst [vmem:[#allocation2 + $0x1c8] sm:$0xff] %v458
        %523 = vst [vmem:[#allocation2 + $0x1e0] sm:$0xff] %v459
        %524 = vst [vmem:[#allocation2 + $0x1e8] sm:$0xff] %v460
        %v525 = vld [vmem:[%s2] sm:$0x3]
        %v526 = vld [vmem:[%s1] sm:$0xff]
        %v527 = vld [vmem:[%s1 + $0x8] sm:$0xff]
        %v528 = vld [vmem:[%s1 + $0x10] sm:$0xff]
        %v529 = vld [vmem:[%s1 + $0x18] sm:$0xff]
        %v530 = vld [vmem:[%s1 + $0x20] sm:$0xff]
        %v531 = vld [vmem:[%s1 + $0x28] sm:$0xff]
        %v532 = vld [vmem:[%s1 + $0x30] sm:$0xff]
        %v533 = vld [vmem:[%s1 + $0x38] sm:$0xff]
        %v534 = vld [vmem:[%s1 + $0x40] sm:$0xff]
        %v535 = vld [vmem:[%s1 + $0x48] sm:$0xff]
        %v536 = vld [vmem:[%s1 + $0x50] sm:$0xff]
        %v537 = vld [vmem:[%s1 + $0x58] sm:$0xff]
        %v538 = vld [vmem:[%s1 + $0x60] sm:$0xff]
        %v539 = vld [vmem:[%s1 + $0x68] sm:$0xff]
        %v540 = vld [vmem:[%s1 + $0x70] sm:$0xff]
        %v541 = vld [vmem:[%s1 + $0x78] sm:$0xff]
        %v542 = vld [vmem:[%s1 + $0x80] sm:$0xff]
        %v543 = vld [vmem:[%s1 + $0x88] sm:$0xff]
        %v544 = vld [vmem:[%s1 + $0x90] sm:$0xff]
        %v545 = vld [vmem:[%s1 + $0x98] sm:$0xff]
        %v546 = vld [vmem:[%s1 + $0xa0] sm:$0xff]
        %v547 = vld [vmem:[%s1 + $0xa8] sm:$0xff]
        %v548 = vld [vmem:[%s1 + $0xb0] sm:$0xff]
        %v549 = vld [vmem:[%s1 + $0xb8] sm:$0xff]
        %v550 = vld [vmem:[%s1 + $0xc0] sm:$0xff]
        %v551 = vld [vmem:[%s1 + $0xc8] sm:$0xff]
        %v552 = vld [vmem:[%s1 + $0xd0] sm:$0xff]
        %v553 = vld [vmem:[%s1 + $0xd8] sm:$0xff]
        %v554 = vld [vmem:[%s1 + $0xe0] sm:$0xff]
        %v555 = vld [vmem:[%s1 + $0xe8] sm:$0xff]
        %v556 = vld [vmem:[%s1 + $0xf0] sm:$0xff]
        %v557 = vld [vmem:[%s1 + $0xf8] sm:$0xff]
        %v590 = vunpack.c.l.b16 %v526
        %v591 = vunpack.c.h.b16 %v526
        %v592 = vunpack.c.l.b16 %v527
        %v593 = vunpack.c.h.b16 %v527
        %v594 = vunpack.c.l.b16 %v528
        %v595 = vunpack.c.h.b16 %v528
        %v596 = vunpack.c.l.b16 %v529
        %v597 = vunpack.c.h.b16 %v529
        %v598 = vunpack.c.l.b16 %v530
        %v599 = vunpack.c.h.b16 %v530
        %v600 = vunpack.c.l.b16 %v531
        %v601 = vunpack.c.h.b16 %v531
        %v602 = vunpack.c.l.b16 %v532
        %v603 = vunpack.c.h.b16 %v532
        %v604 = vunpack.c.l.b16 %v533
        %v605 = vunpack.c.h.b16 %v533
        %v606 = vunpack.c.l.b16 %v534
        %v607 = vunpack.c.h.b16 %v534
        %v608 = vunpack.c.l.b16 %v535
        %v609 = vunpack.c.h.b16 %v535
        %v610 = vunpack.c.l.b16 %v536
        %v611 = vunpack.c.h.b16 %v536
        %v612 = vunpack.c.l.b16 %v537
        %v613 = vunpack.c.h.b16 %v537
        %v614 = vunpack.c.l.b16 %v538
        %v615 = vunpack.c.h.b16 %v538
        %v616 = vunpack.c.l.b16 %v539
        %v617 = vunpack.c.h.b16 %v539
        %v618 = vunpack.c.l.b16 %v540
        %v619 = vunpack.c.h.b16 %v540
        %v620 = vunpack.c.l.b16 %v541
        %v621 = vunpack.c.h.b16 %v541
        %v622 = vunpack.c.l.b16 %v542
        %v623 = vunpack.c.h.b16 %v542
        %v624 = vunpack.c.l.b16 %v543
        %v625 = vunpack.c.h.b16 %v543
        %v626 = vunpack.c.l.b16 %v544
        %v627 = vunpack.c.h.b16 %v544
        %v628 = vunpack.c.l.b16 %v545
        %v629 = vunpack.c.h.b16 %v545
        %v630 = vunpack.c.l.b16 %v546
        %v631 = vunpack.c.h.b16 %v546
        %v632 = vunpack.c.l.b16 %v547
        %v633 = vunpack.c.h.b16 %v547
        %v634 = vunpack.c.l.b16 %v548
        %v635 = vunpack.c.h.b16 %v548
        %v636 = vunpack.c.l.b16 %v549
        %v637 = vunpack.c.h.b16 %v549
        %v638 = vunpack.c.l.b16 %v550
        %v639 = vunpack.c.h.b16 %v550
        %v640 = vunpack.c.l.b16 %v551
        %v641 = vunpack.c.h.b16 %v551
        %v642 = vunpack.c.l.b16 %v552
        %v643 = vunpack.c.h.b16 %v552
        %v644 = vunpack.c.l.b16 %v553
        %v645 = vunpack.c.h.b16 %v553
        %v646 = vunpack.c.l.b16 %v554
        %v647 = vunpack.c.h.b16 %v554
        %v648 = vunpack.c.l.b16 %v555
        %v649 = vunpack.c.h.b16 %v555
        %v650 = vunpack.c.l.b16 %v556
        %v651 = vunpack.c.h.b16 %v556
        %v652 = vunpack.c.l.b16 %v557
        %v653 = vunpack.c.h.b16 %v557
        %v654 = vpack.c.b16 %v592, %v590
        %v655 = vpack.c.b16 %v593, %v591
        %v656 = vpack.c.b16 %v596, %v594
        %v657 = vpack.c.b16 %v597, %v595
        %v658 = vpack.c.b16 %v600, %v598
        %v659 = vpack.c.b16 %v601, %v599
        %v660 = vpack.c.b16 %v604, %v602
        %v661 = vpack.c.b16 %v605, %v603
        %v662 = vpack.c.b16 %v608, %v606
        %v663 = vpack.c.b16 %v609, %v607
        %v664 = vpack.c.b16 %v612, %v610
        %v665 = vpack.c.b16 %v613, %v611
        %v666 = vpack.c.b16 %v616, %v614
        %v667 = vpack.c.b16 %v617, %v615
        %v668 = vpack.c.b16 %v620, %v618
        %v669 = vpack.c.b16 %v621, %v619
        %v670 = vpack.c.b16 %v624, %v622
        %v671 = vpack.c.b16 %v625, %v623
        %v672 = vpack.c.b16 %v628, %v626
        %v673 = vpack.c.b16 %v629, %v627
        %v674 = vpack.c.b16 %v632, %v630
        %v675 = vpack.c.b16 %v633, %v631
        %v676 = vpack.c.b16 %v636, %v634
        %v677 = vpack.c.b16 %v637, %v635
        %v678 = vpack.c.b16 %v640, %v638
        %v679 = vpack.c.b16 %v641, %v639
        %v680 = vpack.c.b16 %v644, %v642
        %v681 = vpack.c.b16 %v645, %v643
        %v682 = vpack.c.b16 %v648, %v646
        %v683 = vpack.c.b16 %v649, %v647
        %v684 = vpack.c.b16 %v652, %v650
        %v685 = vpack.c.b16 %v653, %v651
        %718 = vmatprep.subr.bf16.mxu0 %v655
        %719 = vmatpush1.bf16.msra.mxu0 %v654
        %720 = vmatprep.subr.bf16.mxu0 %v657
        %721 = vmatpush1.bf16.msra.mxu0 %v656
        %722 = vmatprep.subr.bf16.mxu0 %v659
        %723 = vmatpush1.bf16.msra.mxu0 %v658
        %724 = vmatprep.subr.bf16.mxu0 %v661
        %725 = vmatpush1.bf16.msra.mxu0 %v660
        %726 = vmatprep.subr.bf16.mxu0 %v663
        %727 = vmatpush1.bf16.msra.mxu0 %v662
        %728 = vmatprep.subr.bf16.mxu0 %v665
        %729 = vmatpush1.bf16.msra.mxu0 %v664
        %730 = vmatprep.subr.bf16.mxu0 %v667
        %731 = vmatpush1.bf16.msra.mxu0 %v666
        %732 = vmatprep.subr.bf16.mxu0 %v669
        %733 = vmatpush1.bf16.msra.mxu0 %v668
        %734 = vmatprep.subr.bf16.mxu0 %v671
        %735 = vmatpush1.bf16.msra.mxu0 %v670
        %736 = vmatprep.subr.bf16.mxu0 %v673
        %737 = vmatpush1.bf16.msra.mxu0 %v672
        %738 = vmatprep.subr.bf16.mxu0 %v675
        %739 = vmatpush1.bf16.msra.mxu0 %v674
        %740 = vmatprep.subr.bf16.mxu0 %v677
        %741 = vmatpush1.bf16.msra.mxu0 %v676
        %742 = vmatprep.subr.bf16.mxu0 %v679
        %743 = vmatpush1.bf16.msra.mxu0 %v678
        %744 = vmatprep.subr.bf16.mxu0 %v681
        %745 = vmatpush1.bf16.msra.mxu0 %v680
        %746 = vmatprep.subr.bf16.mxu0 %v683
        %747 = vmatpush1.bf16.msra.mxu0 %v682
        %748 = vmatprep.subr.bf16.mxu0 %v685
        %749 = vmatpush1.bf16.msra.mxu0 %v684
        %750 = vmatprep.mubr.bf16.mxu0 %v430
        %751 = vmatmul.mubr.bf16.gmra.mrb[0].mxu0 %v429
        %v752 = vpop.f32.mrb[0].mxu0
        %v753 = vadd.f32 0.0, %v752
        %v754 = vpop.f32.mrb[0].mxu0
        %v755 = vadd.f32 0.0, %v754
        %v756 = vpop.f32.mrb[0].mxu0
        %v757 = vadd.f32 0.0, %v756
        %v758 = vpop.f32.mrb[0].mxu0
        %v759 = vadd.f32 0.0, %v758
        %760 = vmatprep.mubr.bf16.mxu0 %v432
        %761 = vmatmul.mubr.bf16.gmra.mrb[0].mxu0 %v431
        %v762 = vpop.f32.mrb[0].mxu0
        %v763 = vadd.f32 0.0, %v762
        %v764 = vpop.f32.mrb[0].mxu0
        %v765 = vadd.f32 0.0, %v764
        %v766 = vpop.f32.mrb[0].mxu0
        %v767 = vadd.f32 0.0, %v766
        %v768 = vpop.f32.mrb[0].mxu0
        %v769 = vadd.f32 0.0, %v768
        %770 = vmatprep.mubr.bf16.mxu0 %v434
        %771 = vmatmul.mubr.bf16.gmra.mrb[0].mxu0 %v433
        %v772 = vpop.f32.mrb[0].mxu0
        %v773 = vadd.f32 0.0, %v772
        %v774 = vpop.f32.mrb[0].mxu0
        %v775 = vadd.f32 0.0, %v774
        %v776 = vpop.f32.mrb[0].mxu0
        %v777 = vadd.f32 0.0, %v776
        %v778 = vpop.f32.mrb[0].mxu0
        %v779 = vadd.f32 0.0, %v778
        %780 = vmatprep.mubr.bf16.mxu0 %v436
        %781 = vmatmul.mubr.bf16.gmra.mrb[0].mxu0 %v435
        %v782 = vpop.f32.mrb[0].mxu0
        %v783 = vadd.f32 0.0, %v782
        %v784 = vpop.f32.mrb[0].mxu0
        %v785 = vadd.f32 0.0, %v784
        %v786 = vpop.f32.mrb[0].mxu0
        %v787 = vadd.f32 0.0, %v786
        %v788 = vpop.f32.mrb[0].mxu0
        %v789 = vadd.f32 0.0, %v788
        %790 = vmatprep.mubr.bf16.mxu0 %v438
        %791 = vmatmul.mubr.bf16.gmra.mrb[0].mxu0 %v437
        %v792 = vpop.f32.mrb[0].mxu0
        %v793 = vadd.f32 0.0, %v792
        %v794 = vpop.f32.mrb[0].mxu0
        %v795 = vadd.f32 0.0, %v794
        %v796 = vpop.f32.mrb[0].mxu0
        %v797 = vadd.f32 0.0, %v796
        %v798 = vpop.f32.mrb[0].mxu0
        %v799 = vadd.f32 0.0, %v798
        %800 = vmatprep.mubr.bf16.mxu0 %v440
        %801 = vmatmul.mubr.bf16.gmra.mrb[0].mxu0 %v439
        %v802 = vpop.f32.mrb[0].mxu0
        %v803 = vadd.f32 0.0, %v802
        %v804 = vpop.f32.mrb[0].mxu0
        %v805 = vadd.f32 0.0, %v804
        %v806 = vpop.f32.mrb[0].mxu0
        %v807 = vadd.f32 0.0, %v806
        %v808 = vpop.f32.mrb[0].mxu0
        %v809 = vadd.f32 0.0, %v808
        %810 = vmatprep.mubr.bf16.mxu0 %v442
        %811 = vmatmul.mubr.bf16.gmra.mrb[0].mxu0 %v441
        %v812 = vpop.f32.mrb[0].mxu0
        %v813 = vadd.f32 0.0, %v812
        %v814 = vpop.f32.mrb[0].mxu0
        %v815 = vadd.f32 0.0, %v814
        %v816 = vpop.f32.mrb[0].mxu0
        %v817 = vadd.f32 0.0, %v816
        %v818 = vpop.f32.mrb[0].mxu0
        %v819 = vadd.f32 0.0, %v818
        %820 = vmatprep.mubr.bf16.mxu0 %v444
        %821 = vmatmul.mubr.bf16.gmra.mrb[0].mxu0 %v443
        %v822 = vpop.f32.mrb[0].mxu0
        %v823 = vadd.f32 0.0, %v822
        %v824 = vpop.f32.mrb[0].mxu0
        %v825 = vadd.f32 0.0, %v824
        %v826 = vpop.f32.mrb[0].mxu0
        %v827 = vadd.f32 0.0, %v826
        %v828 = vpop.f32.mrb[0].mxu0
        %v829 = vadd.f32 0.0, %v828
        %830 = vmatprep.mubr.bf16.mxu0 %v446
        %831 = vmatmul.mubr.bf16.gmra.mrb[0].mxu0 %v445
        %v832 = vpop.f32.mrb[0].mxu0
        %v833 = vadd.f32 0.0, %v832
        %v834 = vpop.f32.mrb[0].mxu0
        %v835 = vadd.f32 0.0, %v834
        %v836 = vpop.f32.mrb[0].mxu0
        %v837 = vadd.f32 0.0, %v836
        %v838 = vpop.f32.mrb[0].mxu0
        %v839 = vadd.f32 0.0, %v838
        %840 = vmatprep.mubr.bf16.mxu0 %v448
        %841 = vmatmul.mubr.bf16.gmra.mrb[0].mxu0 %v447
        %v842 = vpop.f32.mrb[0].mxu0
        %v843 = vadd.f32 0.0, %v842
        %v844 = vpop.f32.mrb[0].mxu0
        %v845 = vadd.f32 0.0, %v844
        %v846 = vpop.f32.mrb[0].mxu0
        %v847 = vadd.f32 0.0, %v846
        %v848 = vpop.f32.mrb[0].mxu0
        %v849 = vadd.f32 0.0, %v848
        %850 = vmatprep.mubr.bf16.mxu0 %v450
        %851 = vmatmul.mubr.bf16.gmra.mrb[0].mxu0 %v449
        %v852 = vpop.f32.mrb[0].mxu0
        %v853 = vadd.f32 0.0, %v852
        %v854 = vpop.f32.mrb[0].mxu0
        %v855 = vadd.f32 0.0, %v854
        %v856 = vpop.f32.mrb[0].mxu0
        %v857 = vadd.f32 0.0, %v856
        %v858 = vpop.f32.mrb[0].mxu0
        %v859 = vadd.f32 0.0, %v858
        %860 = vmatprep.mubr.bf16.mxu0 %v452
        %861 = vmatmul.mubr.bf16.gmra.mrb[0].mxu0 %v451
        %v862 = vpop.f32.mrb[0].mxu0
        %v863 = vadd.f32 0.0, %v862
        %v864 = vpop.f32.mrb[0].mxu0
        %v865 = vadd.f32 0.0, %v864
        %v866 = vpop.f32.mrb[0].mxu0
        %v867 = vadd.f32 0.0, %v866
        %v868 = vpop.f32.mrb[0].mxu0
        %v869 = vadd.f32 0.0, %v868
        %870 = vmatprep.mubr.bf16.mxu0 %v454
        %871 = vmatmul.mubr.bf16.gmra.mrb[0].mxu0 %v453
        %v872 = vpop.f32.mrb[0].mxu0
        %v873 = vadd.f32 0.0, %v872
        %v874 = vpop.f32.mrb[0].mxu0
        %v875 = vadd.f32 0.0, %v874
        %v876 = vpop.f32.mrb[0].mxu0
        %v877 = vadd.f32 0.0, %v876
        %v878 = vpop.f32.mrb[0].mxu0
        %v879 = vadd.f32 0.0, %v878
        %880 = vmatprep.mubr.bf16.mxu0 %v456
        %881 = vmatmul.mubr.bf16.gmra.mrb[0].mxu0 %v455
        %v882 = vpop.f32.mrb[0].mxu0
        %v883 = vadd.f32 0.0, %v882
        %v884 = vpop.f32.mrb[0].mxu0
        %v885 = vadd.f32 0.0, %v884
        %v886 = vpop.f32.mrb[0].mxu0
        %v887 = vadd.f32 0.0, %v886
        %v888 = vpop.f32.mrb[0].mxu0
        %v889 = vadd.f32 0.0, %v888
        %890 = vmatprep.mubr.bf16.mxu0 %v458
        %891 = vmatmul.mubr.bf16.gmra.mrb[0].mxu0 %v457
        %v892 = vpop.f32.mrb[0].mxu0
        %v893 = vadd.f32 0.0, %v892
        %v894 = vpop.f32.mrb[0].mxu0
        %v895 = vadd.f32 0.0, %v894
        %v896 = vpop.f32.mrb[0].mxu0
        %v897 = vadd.f32 0.0, %v896
        %v898 = vpop.f32.mrb[0].mxu0
        %v899 = vadd.f32 0.0, %v898
        %900 = vmatprep.mubr.bf16.mxu0 %v460
        %901 = vmatmul.mubr.bf16.gmra.mrb[0].mxu0 %v459
        %v902 = vpop.f32.mrb[0].mxu0
        %v903 = vadd.f32 0.0, %v902
        %v904 = vpop.f32.mrb[0].mxu0
        %v905 = vadd.f32 0.0, %v904
        %v906 = vpop.f32.mrb[0].mxu0
        %v907 = vadd.f32 0.0, %v906
        %v908 = vpop.f32.mrb[0].mxu0
        %v909 = vadd.f32 0.0, %v908
        %910 = vdwg.mxu0
        %v912 = vlaneseq
        %v913 = vshrl.u32 %v912, 7
        %v914 = vsub.s32 0, %v913
        %v915 = vrot.slane %v525, %v914
        %v916 = vlaneseq
        %v917 = vshrl.u32 %v916, 7
        %v918 = vsub.s32 1, %v917
        %v919 = vrot.slane %v525, %v918
        %v922 = vadd.f32 %v915, %v753
        %v923 = vadd.f32 %v919, %v755
        %v924 = vadd.f32 %v915, %v757
        %v925 = vadd.f32 %v919, %v759
        %v926 = vadd.f32 %v915, %v763
        %v927 = vadd.f32 %v919, %v765
        %v928 = vadd.f32 %v915, %v767
        %v929 = vadd.f32 %v919, %v769
        %v930 = vadd.f32 %v915, %v773
        %v931 = vadd.f32 %v919, %v775
        %v932 = vadd.f32 %v915, %v777
        %v933 = vadd.f32 %v919, %v779
        %v934 = vadd.f32 %v915, %v783
        %v935 = vadd.f32 %v919, %v785
        %v936 = vadd.f32 %v915, %v787
        %v937 = vadd.f32 %v919, %v789
        %v938 = vadd.f32 %v915, %v793
        %v939 = vadd.f32 %v919, %v795
        %v940 = vadd.f32 %v915, %v797
        %v941 = vadd.f32 %v919, %v799
        %v942 = vadd.f32 %v915, %v803
        %v943 = vadd.f32 %v919, %v805
        %v944 = vadd.f32 %v915, %v807
        %v945 = vadd.f32 %v919, %v809
        %v946 = vadd.f32 %v915, %v813
        %v947 = vadd.f32 %v919, %v815
        %v948 = vadd.f32 %v915, %v817
        %v949 = vadd.f32 %v919, %v819
        %v950 = vadd.f32 %v915, %v823
        %v951 = vadd.f32 %v919, %v825
        %v952 = vadd.f32 %v915, %v827
        %v953 = vadd.f32 %v919, %v829
        %v954 = vadd.f32 %v915, %v833
        %v955 = vadd.f32 %v919, %v835
        %v956 = vadd.f32 %v915, %v837
        %v957 = vadd.f32 %v919, %v839
        %v958 = vadd.f32 %v915, %v843
        %v959 = vadd.f32 %v919, %v845
        %v960 = vadd.f32 %v915, %v847
        %v961 = vadd.f32 %v919, %v849
        %v962 = vadd.f32 %v915, %v853
        %v963 = vadd.f32 %v919, %v855
        %v964 = vadd.f32 %v915, %v857
        %v965 = vadd.f32 %v919, %v859
        %v966 = vadd.f32 %v915, %v863
        %v967 = vadd.f32 %v919, %v865
        %v968 = vadd.f32 %v915, %v867
        %v969 = vadd.f32 %v919, %v869
        %v970 = vadd.f32 %v915, %v873
        %v971 = vadd.f32 %v919, %v875
        %v972 = vadd.f32 %v915, %v877
        %v973 = vadd.f32 %v919, %v879
        %v974 = vadd.f32 %v915, %v883
        %v975 = vadd.f32 %v919, %v885
        %v976 = vadd.f32 %v915, %v887
        %v977 = vadd.f32 %v919, %v889
        %v978 = vadd.f32 %v915, %v893
        %v979 = vadd.f32 %v919, %v895
        %v980 = vadd.f32 %v915, %v897
        %v981 = vadd.f32 %v919, %v899
        %v982 = vadd.f32 %v915, %v903
        %v983 = vadd.f32 %v919, %v905
        %v984 = vadd.f32 %v915, %v907
        %v985 = vadd.f32 %v919, %v909
        %v986 = vtanh.pop %v922
        %v987 = vtanh.pop %v923
        %v988 = vtanh.pop %v924
        %v989 = vtanh.pop %v925
        %v990 = vtanh.pop %v926
        %v991 = vtanh.pop %v927
        %v992 = vtanh.pop %v928
        %v993 = vtanh.pop %v929
        %v994 = vtanh.pop %v930
        %v995 = vtanh.pop %v931
        %v996 = vtanh.pop %v932
        %v997 = vtanh.pop %v933
        %v998 = vtanh.pop %v934
        %v999 = vtanh.pop %v935
        %v1000 = vtanh.pop %v936
        %v1001 = vtanh.pop %v937
        %v1002 = vtanh.pop %v938
        %v1003 = vtanh.pop %v939
        %v1004 = vtanh.pop %v940
        %v1005 = vtanh.pop %v941
        %v1006 = vtanh.pop %v942
        %v1007 = vtanh.pop %v943
        %v1008 = vtanh.pop %v944
        %v1009 = vtanh.pop %v945
        %v1010 = vtanh.pop %v946
        %v1011 = vtanh.pop %v947
        %v1012 = vtanh.pop %v948
        %v1013 = vtanh.pop %v949
        %v1014 = vtanh.pop %v950
        %v1015 = vtanh.pop %v951
        %v1016 = vtanh.pop %v952
        %v1017 = vtanh.pop %v953
        %v1018 = vtanh.pop %v954
        %v1019 = vtanh.pop %v955
        %v1020 = vtanh.pop %v956
        %v1021 = vtanh.pop %v957
        %v1022 = vtanh.pop %v958
        %v1023 = vtanh.pop %v959
        %v1024 = vtanh.pop %v960
        %v1025 = vtanh.pop %v961
        %v1026 = vtanh.pop %v962
        %v1027 = vtanh.pop %v963
        %v1028 = vtanh.pop %v964
        %v1029 = vtanh.pop %v965
        %v1030 = vtanh.pop %v966
        %v1031 = vtanh.pop %v967
        %v1032 = vtanh.pop %v968
        %v1033 = vtanh.pop %v969
        %v1034 = vtanh.pop %v970
        %v1035 = vtanh.pop %v971
        %v1036 = vtanh.pop %v972
        %v1037 = vtanh.pop %v973
        %v1038 = vtanh.pop %v974
        %v1039 = vtanh.pop %v975
        %v1040 = vtanh.pop %v976
        %v1041 = vtanh.pop %v977
        %v1042 = vtanh.pop %v978
        %v1043 = vtanh.pop %v979
        %v1044 = vtanh.pop %v980
        %v1045 = vtanh.pop %v981
        %v1046 = vtanh.pop %v982
        %v1047 = vtanh.pop %v983
        %v1048 = vtanh.pop %v984
        %v1049 = vtanh.pop %v985
        %v1050 = vpack.c.bf16 %v988, %v986
        %v1051 = vpack.c.bf16 %v989, %v987
        %v1052 = vpack.c.bf16 %v992, %v990
        %v1053 = vpack.c.bf16 %v993, %v991
        %v1054 = vpack.c.bf16 %v996, %v994
        %v1055 = vpack.c.bf16 %v997, %v995
        %v1056 = vpack.c.bf16 %v1000, %v998
        %v1057 = vpack.c.bf16 %v1001, %v999
        %v1058 = vpack.c.bf16 %v1004, %v1002
        %v1059 = vpack.c.bf16 %v1005, %v1003
        %v1060 = vpack.c.bf16 %v1008, %v1006
        %v1061 = vpack.c.bf16 %v1009, %v1007
        %v1062 = vpack.c.bf16 %v1012, %v1010
        %v1063 = vpack.c.bf16 %v1013, %v1011
        %v1064 = vpack.c.bf16 %v1016, %v1014
        %v1065 = vpack.c.bf16 %v1017, %v1015
        %v1066 = vpack.c.bf16 %v1020, %v1018
        %v1067 = vpack.c.bf16 %v1021, %v1019
        %v1068 = vpack.c.bf16 %v1024, %v1022
        %v1069 = vpack.c.bf16 %v1025, %v1023
        %v1070 = vpack.c.bf16 %v1028, %v1026
        %v1071 = vpack.c.bf16 %v1029, %v1027
        %v1072 = vpack.c.bf16 %v1032, %v1030
        %v1073 = vpack.c.bf16 %v1033, %v1031
        %v1074 = vpack.c.bf16 %v1036, %v1034
        %v1075 = vpack.c.bf16 %v1037, %v1035
        %v1076 = vpack.c.bf16 %v1040, %v1038
        %v1077 = vpack.c.bf16 %v1041, %v1039
        %v1078 = vpack.c.bf16 %v1044, %v1042
        %v1079 = vpack.c.bf16 %v1045, %v1043
        %v1080 = vpack.c.bf16 %v1048, %v1046
        %v1081 = vpack.c.bf16 %v1049, %v1047
        %1082 = vst [vmem:[#allocation2 + $0x10] sm:$0xff] %v1050
        %1083 = vst [vmem:[#allocation2 + $0x18] sm:$0xff] %v1051
        %1084 = vst [vmem:[#allocation2 + $0x30] sm:$0xff] %v1052
        %1085 = vst [vmem:[#allocation2 + $0x38] sm:$0xff] %v1053
        %1086 = vst [vmem:[#allocation2 + $0x50] sm:$0xff] %v1054
        %1087 = vst [vmem:[#allocation2 + $0x58] sm:$0xff] %v1055
        %1088 = vst [vmem:[#allocation2 + $0x70] sm:$0xff] %v1056
        %1089 = vst [vmem:[#allocation2 + $0x78] sm:$0xff] %v1057
        %1090 = vst [vmem:[#allocation2 + $0x90] sm:$0xff] %v1058
        %1091 = vst [vmem:[#allocation2 + $0x98] sm:$0xff] %v1059
        %1092 = vst [vmem:[#allocation2 + $0xb0] sm:$0xff] %v1060
        %1093 = vst [vmem:[#allocation2 + $0xb8] sm:$0xff] %v1061
        %1094 = vst [vmem:[#allocation2 + $0xd0] sm:$0xff] %v1062
        %1095 = vst [vmem:[#allocation2 + $0xd8] sm:$0xff] %v1063
        %1096 = vst [vmem:[#allocation2 + $0xf0] sm:$0xff] %v1064
        %1097 = vst [vmem:[#allocation2 + $0xf8] sm:$0xff] %v1065
        %1098 = vst [vmem:[#allocation2 + $0x110] sm:$0xff] %v1066
        %1099 = vst [vmem:[#allocation2 + $0x118] sm:$0xff] %v1067
        %1100 = vst [vmem:[#allocation2 + $0x130] sm:$0xff] %v1068
        %1101 = vst [vmem:[#allocation2 + $0x138] sm:$0xff] %v1069
        %1102 = vst [vmem:[#allocation2 + $0x150] sm:$0xff] %v1070
        %1103 = vst [vmem:[#allocation2 + $0x158] sm:$0xff] %v1071
        %1104 = vst [vmem:[#allocation2 + $0x170] sm:$0xff] %v1072
        %1105 = vst [vmem:[#allocation2 + $0x178] sm:$0xff] %v1073
        %1106 = vst [vmem:[#allocation2 + $0x190] sm:$0xff] %v1074
        %1107 = vst [vmem:[#allocation2 + $0x198] sm:$0xff] %v1075
        %1108 = vst [vmem:[#allocation2 + $0x1b0] sm:$0xff] %v1076
        %1109 = vst [vmem:[#allocation2 + $0x1b8] sm:$0xff] %v1077
        %1110 = vst [vmem:[#allocation2 + $0x1d0] sm:$0xff] %v1078
        %1111 = vst [vmem:[#allocation2 + $0x1d8] sm:$0xff] %v1079
        %1112 = vst [vmem:[#allocation2 + $0x1f0] sm:$0xff] %v1080
        %1113 = vst [vmem:[#allocation2 + $0x1f8] sm:$0xff] %v1081
      $region44: #{nnlm_forward.1} parent=39 // pred_fallthru
        _
      %v1114 = vld [vmem:[%s283] sm:$0x3]
      %v1115 = vld [vmem:[#allocation2] sm:$0xff]
      %v1116 = vld [vmem:[#allocation2 + $0x8] sm:$0xff]
      %v1117 = vld [vmem:[#allocation2 + $0x10] sm:$0xff]
      %v1118 = vld [vmem:[#allocation2 + $0x18] sm:$0xff]
      %v1119 = vld [vmem:[#allocation2 + $0x20] sm:$0xff]
      %v1120 = vld [vmem:[#allocation2 + $0x28] sm:$0xff]
      %v1121 = vld [vmem:[#allocation2 + $0x30] sm:$0xff]
      %v1122 = vld [vmem:[#allocation2 + $0x38] sm:$0xff]
      %v1123 = vld [vmem:[#allocation2 + $0x40] sm:$0xff]
      %v1124 = vld [vmem:[#allocation2 + $0x48] sm:$0xff]
      %v1125 = vld [vmem:[#allocation2 + $0x50] sm:$0xff]
      %v1126 = vld [vmem:[#allocation2 + $0x58] sm:$0xff]
      %v1127 = vld [vmem:[#allocation2 + $0x60] sm:$0xff]
      %v1128 = vld [vmem:[#allocation2 + $0x68] sm:$0xff]
      %v1129 = vld [vmem:[#allocation2 + $0x70] sm:$0xff]
      %v1130 = vld [vmem:[#allocation2 + $0x78] sm:$0xff]
      %v1131 = vld [vmem:[#allocation2 + $0x80] sm:$0xff]
      %v1132 = vld [vmem:[#allocation2 + $0x88] sm:$0xff]
      %v1133 = vld [vmem:[#allocation2 + $0x90] sm:$0xff]
      %v1134 = vld [vmem:[#allocation2 + $0x98] sm:$0xff]
      %v1135 = vld [vmem:[#allocation2 + $0xa0] sm:$0xff]
      %v1136 = vld [vmem:[#allocation2 + $0xa8] sm:$0xff]
      %v1137 = vld [vmem:[#allocation2 + $0xb0] sm:$0xff]
      %v1138 = vld [vmem:[#allocation2 + $0xb8] sm:$0xff]
      %v1139 = vld [vmem:[#allocation2 + $0xc0] sm:$0xff]
      %v1140 = vld [vmem:[#allocation2 + $0xc8] sm:$0xff]
      %v1141 = vld [vmem:[#allocation2 + $0xd0] sm:$0xff]
      %v1142 = vld [vmem:[#allocation2 + $0xd8] sm:$0xff]
      %v1143 = vld [vmem:[#allocation2 + $0xe0] sm:$0xff]
      %v1144 = vld [vmem:[#allocation2 + $0xe8] sm:$0xff]
      %v1145 = vld [vmem:[#allocation2 + $0xf0] sm:$0xff]
      %v1146 = vld [vmem:[#allocation2 + $0xf8] sm:$0xff]
      %v1147 = vld [vmem:[#allocation2 + $0x100] sm:$0xff]
      %v1148 = vld [vmem:[#allocation2 + $0x108] sm:$0xff]
      %v1149 = vld [vmem:[#allocation2 + $0x110] sm:$0xff]
      %v1150 = vld [vmem:[#allocation2 + $0x118] sm:$0xff]
      %v1151 = vld [vmem:[#allocation2 + $0x120] sm:$0xff]
      %v1152 = vld [vmem:[#allocation2 + $0x128] sm:$0xff]
      %v1153 = vld [vmem:[#allocation2 + $0x130] sm:$0xff]
      %v1154 = vld [vmem:[#allocation2 + $0x138] sm:$0xff]
      %v1155 = vld [vmem:[#allocation2 + $0x140] sm:$0xff]
      %v1156 = vld [vmem:[#allocation2 + $0x148] sm:$0xff]
      %v1157 = vld [vmem:[#allocation2 + $0x150] sm:$0xff]
      %v1158 = vld [vmem:[#allocation2 + $0x158] sm:$0xff]
      %v1159 = vld [vmem:[#allocation2 + $0x160] sm:$0xff]
      %v1160 = vld [vmem:[#allocation2 + $0x168] sm:$0xff]
      %v1161 = vld [vmem:[#allocation2 + $0x170] sm:$0xff]
      %v1162 = vld [vmem:[#allocation2 + $0x178] sm:$0xff]
      %v1163 = vld [vmem:[#allocation2 + $0x180] sm:$0xff]
      %v1164 = vld [vmem:[#allocation2 + $0x188] sm:$0xff]
      %v1165 = vld [vmem:[#allocation2 + $0x190] sm:$0xff]
      %v1166 = vld [vmem:[#allocation2 + $0x198] sm:$0xff]
      %v1167 = vld [vmem:[#allocation2 + $0x1a0] sm:$0xff]
      %v1168 = vld [vmem:[#allocation2 + $0x1a8] sm:$0xff]
      %v1169 = vld [vmem:[#allocation2 + $0x1b0] sm:$0xff]
      %v1170 = vld [vmem:[#allocation2 + $0x1b8] sm:$0xff]
      %v1171 = vld [vmem:[#allocation2 + $0x1c0] sm:$0xff]
      %v1172 = vld [vmem:[#allocation2 + $0x1c8] sm:$0xff]
      %v1173 = vld [vmem:[#allocation2 + $0x1d0] sm:$0xff]
      %v1174 = vld [vmem:[#allocation2 + $0x1d8] sm:$0xff]
      %v1175 = vld [vmem:[#allocation2 + $0x1e0] sm:$0xff]
      %v1176 = vld [vmem:[#allocation2 + $0x1e8] sm:$0xff]
      %v1177 = vld [vmem:[#allocation2 + $0x1f0] sm:$0xff]
      %v1178 = vld [vmem:[#allocation2 + $0x1f8] sm:$0xff]
      %v1179 = vld [vmem:[%s278] sm:$0xff]
      %v1180 = vld [vmem:[%s278 + $0x8] sm:$0xff]
      %v1181 = vld [vmem:[%s278 + $0x10] sm:$0xff]
      %v1182 = vld [vmem:[%s278 + $0x18] sm:$0xff]
      %v1183 = vld [vmem:[%s278 + $0x20] sm:$0xff]
      %v1184 = vld [vmem:[%s278 + $0x28] sm:$0xff]
      %v1185 = vld [vmem:[%s278 + $0x30] sm:$0xff]
      %v1186 = vld [vmem:[%s278 + $0x38] sm:$0xff]
      %v1187 = vld [vmem:[%s278 + $0x40] sm:$0xff]
      %v1188 = vld [vmem:[%s278 + $0x48] sm:$0xff]
      %v1189 = vld [vmem:[%s278 + $0x50] sm:$0xff]
      %v1190 = vld [vmem:[%s278 + $0x58] sm:$0xff]
      %v1191 = vld [vmem:[%s278 + $0x60] sm:$0xff]
      %v1192 = vld [vmem:[%s278 + $0x68] sm:$0xff]
      %v1193 = vld [vmem:[%s278 + $0x70] sm:$0xff]
      %v1194 = vld [vmem:[%s278 + $0x78] sm:$0xff]
      %v1195 = vld [vmem:[%s278 + $0x80] sm:$0xff]
      %v1196 = vld [vmem:[%s278 + $0x88] sm:$0xff]
      %v1197 = vld [vmem:[%s278 + $0x90] sm:$0xff]
      %v1198 = vld [vmem:[%s278 + $0x98] sm:$0xff]
      %v1199 = vld [vmem:[%s278 + $0xa0] sm:$0xff]
      %v1200 = vld [vmem:[%s278 + $0xa8] sm:$0xff]
      %v1201 = vld [vmem:[%s278 + $0xb0] sm:$0xff]
      %v1202 = vld [vmem:[%s278 + $0xb8] sm:$0xff]
      %v1203 = vld [vmem:[%s278 + $0xc0] sm:$0xff]
      %v1204 = vld [vmem:[%s278 + $0xc8] sm:$0xff]
      %v1205 = vld [vmem:[%s278 + $0xd0] sm:$0xff]
      %v1206 = vld [vmem:[%s278 + $0xd8] sm:$0xff]
      %v1207 = vld [vmem:[%s278 + $0xe0] sm:$0xff]
      %v1208 = vld [vmem:[%s278 + $0xe8] sm:$0xff]
      %v1209 = vld [vmem:[%s278 + $0xf0] sm:$0xff]
      %v1210 = vld [vmem:[%s278 + $0xf8] sm:$0xff]
      %v1211 = vld [vmem:[%s278 + $0x100] sm:$0xff]
      %v1212 = vld [vmem:[%s278 + $0x108] sm:$0xff]
      %v1213 = vld [vmem:[%s278 + $0x110] sm:$0xff]
      %v1214 = vld [vmem:[%s278 + $0x118] sm:$0xff]
      %v1215 = vld [vmem:[%s278 + $0x120] sm:$0xff]
      %v1216 = vld [vmem:[%s278 + $0x128] sm:$0xff]
      %v1217 = vld [vmem:[%s278 + $0x130] sm:$0xff]
      %v1218 = vld [vmem:[%s278 + $0x138] sm:$0xff]
      %v1219 = vld [vmem:[%s278 + $0x140] sm:$0xff]
      %v1220 = vld [vmem:[%s278 + $0x148] sm:$0xff]
      %v1221 = vld [vmem:[%s278 + $0x150] sm:$0xff]
      %v1222 = vld [vmem:[%s278 + $0x158] sm:$0xff]
      %v1223 = vld [vmem:[%s278 + $0x160] sm:$0xff]
      %v1224 = vld [vmem:[%s278 + $0x168] sm:$0xff]
      %v1225 = vld [vmem:[%s278 + $0x170] sm:$0xff]
      %v1226 = vld [vmem:[%s278 + $0x178] sm:$0xff]
      %v1227 = vld [vmem:[%s278 + $0x180] sm:$0xff]
      %v1228 = vld [vmem:[%s278 + $0x188] sm:$0xff]
      %v1229 = vld [vmem:[%s278 + $0x190] sm:$0xff]
      %v1230 = vld [vmem:[%s278 + $0x198] sm:$0xff]
      %v1231 = vld [vmem:[%s278 + $0x1a0] sm:$0xff]
      %v1232 = vld [vmem:[%s278 + $0x1a8] sm:$0xff]
      %v1233 = vld [vmem:[%s278 + $0x1b0] sm:$0xff]
      %v1234 = vld [vmem:[%s278 + $0x1b8] sm:$0xff]
      %v1235 = vld [vmem:[%s278 + $0x1c0] sm:$0xff]
      %v1236 = vld [vmem:[%s278 + $0x1c8] sm:$0xff]
      %v1237 = vld [vmem:[%s278 + $0x1d0] sm:$0xff]
      %v1238 = vld [vmem:[%s278 + $0x1d8] sm:$0xff]
      %v1239 = vld [vmem:[%s278 + $0x1e0] sm:$0xff]
      %v1240 = vld [vmem:[%s278 + $0x1e8] sm:$0xff]
      %v1241 = vld [vmem:[%s278 + $0x1f0] sm:$0xff]
      %v1242 = vld [vmem:[%s278 + $0x1f8] sm:$0xff]
      %v1307 = vunpack.c.l.b16 %v1179
      %v1308 = vunpack.c.h.b16 %v1179
      %v1309 = vunpack.c.l.b16 %v1180
      %v1310 = vunpack.c.h.b16 %v1180
      %v1311 = vunpack.c.l.b16 %v1181
      %v1312 = vunpack.c.h.b16 %v1181
      %v1313 = vunpack.c.l.b16 %v1182
      %v1314 = vunpack.c.h.b16 %v1182
      %v1315 = vunpack.c.l.b16 %v1183
      %v1316 = vunpack.c.h.b16 %v1183
      %v1317 = vunpack.c.l.b16 %v1184
      %v1318 = vunpack.c.h.b16 %v1184
      %v1319 = vunpack.c.l.b16 %v1185
      %v1320 = vunpack.c.h.b16 %v1185
      %v1321 = vunpack.c.l.b16 %v1186
      %v1322 = vunpack.c.h.b16 %v1186
      %v1323 = vunpack.c.l.b16 %v1187
      %v1324 = vunpack.c.h.b16 %v1187
      %v1325 = vunpack.c.l.b16 %v1188
      %v1326 = vunpack.c.h.b16 %v1188
      %v1327 = vunpack.c.l.b16 %v1189
      %v1328 = vunpack.c.h.b16 %v1189
      %v1329 = vunpack.c.l.b16 %v1190
      %v1330 = vunpack.c.h.b16 %v1190
      %v1331 = vunpack.c.l.b16 %v1191
      %v1332 = vunpack.c.h.b16 %v1191
      %v1333 = vunpack.c.l.b16 %v1192
      %v1334 = vunpack.c.h.b16 %v1192
      %v1335 = vunpack.c.l.b16 %v1193
      %v1336 = vunpack.c.h.b16 %v1193
      %v1337 = vunpack.c.l.b16 %v1194
      %v1338 = vunpack.c.h.b16 %v1194
      %v1339 = vunpack.c.l.b16 %v1195
      %v1340 = vunpack.c.h.b16 %v1195
      %v1341 = vunpack.c.l.b16 %v1196
      %v1342 = vunpack.c.h.b16 %v1196
      %v1343 = vunpack.c.l.b16 %v1197
      %v1344 = vunpack.c.h.b16 %v1197
      %v1345 = vunpack.c.l.b16 %v1198
      %v1346 = vunpack.c.h.b16 %v1198
      %v1347 = vunpack.c.l.b16 %v1199
      %v1348 = vunpack.c.h.b16 %v1199
      %v1349 = vunpack.c.l.b16 %v1200
      %v1350 = vunpack.c.h.b16 %v1200
      %v1351 = vunpack.c.l.b16 %v1201
      %v1352 = vunpack.c.h.b16 %v1201
      %v1353 = vunpack.c.l.b16 %v1202
      %v1354 = vunpack.c.h.b16 %v1202
      %v1355 = vunpack.c.l.b16 %v1203
      %v1356 = vunpack.c.h.b16 %v1203
      %v1357 = vunpack.c.l.b16 %v1204
      %v1358 = vunpack.c.h.b16 %v1204
      %v1359 = vunpack.c.l.b16 %v1205
      %v1360 = vunpack.c.h.b16 %v1205
      %v1361 = vunpack.c.l.b16 %v1206
      %v1362 = vunpack.c.h.b16 %v1206
      %v1363 = vunpack.c.l.b16 %v1207
      %v1364 = vunpack.c.h.b16 %v1207
      %v1365 = vunpack.c.l.b16 %v1208
      %v1366 = vunpack.c.h.b16 %v1208
      %v1367 = vunpack.c.l.b16 %v1209
      %v1368 = vunpack.c.h.b16 %v1209
      %v1369 = vunpack.c.l.b16 %v1210
      %v1370 = vunpack.c.h.b16 %v1210
      %v1371 = vunpack.c.l.b16 %v1211
      %v1372 = vunpack.c.h.b16 %v1211
      %v1373 = vunpack.c.l.b16 %v1212
      %v1374 = vunpack.c.h.b16 %v1212
      %v1375 = vunpack.c.l.b16 %v1213
      %v1376 = vunpack.c.h.b16 %v1213
      %v1377 = vunpack.c.l.b16 %v1214
      %v1378 = vunpack.c.h.b16 %v1214
      %v1379 = vunpack.c.l.b16 %v1215
      %v1380 = vunpack.c.h.b16 %v1215
      %v1381 = vunpack.c.l.b16 %v1216
      %v1382 = vunpack.c.h.b16 %v1216
      %v1383 = vunpack.c.l.b16 %v1217
      %v1384 = vunpack.c.h.b16 %v1217
      %v1385 = vunpack.c.l.b16 %v1218
      %v1386 = vunpack.c.h.b16 %v1218
      %v1387 = vunpack.c.l.b16 %v1219
      %v1388 = vunpack.c.h.b16 %v1219
      %v1389 = vunpack.c.l.b16 %v1220
      %v1390 = vunpack.c.h.b16 %v1220
      %v1391 = vunpack.c.l.b16 %v1221
      %v1392 = vunpack.c.h.b16 %v1221
      %v1393 = vunpack.c.l.b16 %v1222
      %v1394 = vunpack.c.h.b16 %v1222
      %v1395 = vunpack.c.l.b16 %v1223
      %v1396 = vunpack.c.h.b16 %v1223
      %v1397 = vunpack.c.l.b16 %v1224
      %v1398 = vunpack.c.h.b16 %v1224
      %v1399 = vunpack.c.l.b16 %v1225
      %v1400 = vunpack.c.h.b16 %v1225
      %v1401 = vunpack.c.l.b16 %v1226
      %v1402 = vunpack.c.h.b16 %v1226
      %v1403 = vunpack.c.l.b16 %v1227
      %v1404 = vunpack.c.h.b16 %v1227
      %v1405 = vunpack.c.l.b16 %v1228
      %v1406 = vunpack.c.h.b16 %v1228
      %v1407 = vunpack.c.l.b16 %v1229
      %v1408 = vunpack.c.h.b16 %v1229
      %v1409 = vunpack.c.l.b16 %v1230
      %v1410 = vunpack.c.h.b16 %v1230
      %v1411 = vunpack.c.l.b16 %v1231
      %v1412 = vunpack.c.h.b16 %v1231
      %v1413 = vunpack.c.l.b16 %v1232
      %v1414 = vunpack.c.h.b16 %v1232
      %v1415 = vunpack.c.l.b16 %v1233
      %v1416 = vunpack.c.h.b16 %v1233
      %v1417 = vunpack.c.l.b16 %v1234
      %v1418 = vunpack.c.h.b16 %v1234
      %v1419 = vunpack.c.l.b16 %v1235
      %v1420 = vunpack.c.h.b16 %v1235
      %v1421 = vunpack.c.l.b16 %v1236
      %v1422 = vunpack.c.h.b16 %v1236
      %v1423 = vunpack.c.l.b16 %v1237
      %v1424 = vunpack.c.h.b16 %v1237
      %v1425 = vunpack.c.l.b16 %v1238
      %v1426 = vunpack.c.h.b16 %v1238
      %v1427 = vunpack.c.l.b16 %v1239
      %v1428 = vunpack.c.h.b16 %v1239
      %v1429 = vunpack.c.l.b16 %v1240
      %v1430 = vunpack.c.h.b16 %v1240
      %v1431 = vunpack.c.l.b16 %v1241
      %v1432 = vunpack.c.h.b16 %v1241
      %v1433 = vunpack.c.l.b16 %v1242
      %v1434 = vunpack.c.h.b16 %v1242
      %v1435 = vpack.c.b16 %v1309, %v1307
      %v1436 = vpack.c.b16 %v1310, %v1308
      %v1437 = vpack.c.b16 %v1313, %v1311
      %v1438 = vpack.c.b16 %v1314, %v1312
      %v1439 = vpack.c.b16 %v1317, %v1315
      %v1440 = vpack.c.b16 %v1318, %v1316
      %v1441 = vpack.c.b16 %v1321, %v1319
      %v1442 = vpack.c.b16 %v1322, %v1320
      %v1443 = vpack.c.b16 %v1325, %v1323
      %v1444 = vpack.c.b16 %v1326, %v1324
      %v1445 = vpack.c.b16 %v1329, %v1327
      %v1446 = vpack.c.b16 %v1330, %v1328
      %v1447 = vpack.c.b16 %v1333, %v1331
      %v1448 = vpack.c.b16 %v1334, %v1332
      %v1449 = vpack.c.b16 %v1337, %v1335
      %v1450 = vpack.c.b16 %v1338, %v1336
      %v1451 = vpack.c.b16 %v1341, %v1339
      %v1452 = vpack.c.b16 %v1342, %v1340
      %v1453 = vpack.c.b16 %v1345, %v1343
      %v1454 = vpack.c.b16 %v1346, %v1344
      %v1455 = vpack.c.b16 %v1349, %v1347
      %v1456 = vpack.c.b16 %v1350, %v1348
      %v1457 = vpack.c.b16 %v1353, %v1351
      %v1458 = vpack.c.b16 %v1354, %v1352
      %v1459 = vpack.c.b16 %v1357, %v1355
      %v1460 = vpack.c.b16 %v1358, %v1356
      %v1461 = vpack.c.b16 %v1361, %v1359
      %v1462 = vpack.c.b16 %v1362, %v1360
      %v1463 = vpack.c.b16 %v1365, %v1363
      %v1464 = vpack.c.b16 %v1366, %v1364
      %v1465 = vpack.c.b16 %v1369, %v1367
      %v1466 = vpack.c.b16 %v1370, %v1368
      %v1467 = vpack.c.b16 %v1373, %v1371
      %v1468 = vpack.c.b16 %v1374, %v1372
      %v1469 = vpack.c.b16 %v1377, %v1375
      %v1470 = vpack.c.b16 %v1378, %v1376
      %v1471 = vpack.c.b16 %v1381, %v1379
      %v1472 = vpack.c.b16 %v1382, %v1380
      %v1473 = vpack.c.b16 %v1385, %v1383
      %v1474 = vpack.c.b16 %v1386, %v1384
      %v1475 = vpack.c.b16 %v1389, %v1387
      %v1476 = vpack.c.b16 %v1390, %v1388
      %v1477 = vpack.c.b16 %v1393, %v1391
      %v1478 = vpack.c.b16 %v1394, %v1392
      %v1479 = vpack.c.b16 %v1397, %v1395
      %v1480 = vpack.c.b16 %v1398, %v1396
      %v1481 = vpack.c.b16 %v1401, %v1399
      %v1482 = vpack.c.b16 %v1402, %v1400
      %v1483 = vpack.c.b16 %v1405, %v1403
      %v1484 = vpack.c.b16 %v1406, %v1404
      %v1485 = vpack.c.b16 %v1409, %v1407
      %v1486 = vpack.c.b16 %v1410, %v1408
      %v1487 = vpack.c.b16 %v1413, %v1411
      %v1488 = vpack.c.b16 %v1414, %v1412
      %v1489 = vpack.c.b16 %v1417, %v1415
      %v1490 = vpack.c.b16 %v1418, %v1416
      %v1491 = vpack.c.b16 %v1421, %v1419
      %v1492 = vpack.c.b16 %v1422, %v1420
      %v1493 = vpack.c.b16 %v1425, %v1423
      %v1494 = vpack.c.b16 %v1426, %v1424
      %v1495 = vpack.c.b16 %v1429, %v1427
      %v1496 = vpack.c.b16 %v1430, %v1428
      %v1497 = vpack.c.b16 %v1433, %v1431
      %v1498 = vpack.c.b16 %v1434, %v1432
      %1563 = vmatprep.subr.bf16.mxu0 %v1436
      %1564 = vmatpush1.bf16.msra.mxu0 %v1435
      %1565 = vmatprep.subr.bf16.mxu0 %v1438
      %1566 = vmatpush1.bf16.msra.mxu0 %v1437
      %1567 = vmatprep.subr.bf16.mxu0 %v1440
      %1568 = vmatpush1.bf16.msra.mxu0 %v1439
      %1569 = vmatprep.subr.bf16.mxu0 %v1442
      %1570 = vmatpush1.bf16.msra.mxu0 %v1441
      %1571 = vmatprep.subr.bf16.mxu0 %v1444
      %1572 = vmatpush1.bf16.msra.mxu0 %v1443
      %1573 = vmatprep.subr.bf16.mxu0 %v1446
      %1574 = vmatpush1.bf16.msra.mxu0 %v1445
      %1575 = vmatprep.subr.bf16.mxu0 %v1448
      %1576 = vmatpush1.bf16.msra.mxu0 %v1447
      %1577 = vmatprep.subr.bf16.mxu0 %v1450
      %1578 = vmatpush1.bf16.msra.mxu0 %v1449
      %1579 = vmatprep.subr.bf16.mxu0 %v1452
      %1580 = vmatpush1.bf16.msra.mxu0 %v1451
      %1581 = vmatprep.subr.bf16.mxu0 %v1454
      %1582 = vmatpush1.bf16.msra.mxu0 %v1453
      %1583 = vmatprep.subr.bf16.mxu0 %v1456
      %1584 = vmatpush1.bf16.msra.mxu0 %v1455
      %1585 = vmatprep.subr.bf16.mxu0 %v1458
      %1586 = vmatpush1.bf16.msra.mxu0 %v1457
      %1587 = vmatprep.subr.bf16.mxu0 %v1460
      %1588 = vmatpush1.bf16.msra.mxu0 %v1459
      %1589 = vmatprep.subr.bf16.mxu0 %v1462
      %1590 = vmatpush1.bf16.msra.mxu0 %v1461
      %1591 = vmatprep.subr.bf16.mxu0 %v1464
      %1592 = vmatpush1.bf16.msra.mxu0 %v1463
      %1593 = vmatprep.subr.bf16.mxu0 %v1466
      %1594 = vmatpush1.bf16.msra.mxu0 %v1465
      %1595 = vmatprep.mubr.bf16.mxu0 %v1116
      %1596 = vmatmul.mubr.bf16.gmra.mrb[0].mxu0 %v1115
      %v1597 = vpop.f32.mrb[0].mxu0
      %v1598 = vadd.f32 0.0, %v1597
      %v1599 = vpop.f32.mrb[0].mxu0
      %v1600 = vadd.f32 0.0, %v1599
      %v1601 = vpop.f32.mrb[0].mxu0
      %v1602 = vadd.f32 0.0, %v1601
      %v1603 = vpop.f32.mrb[0].mxu0
      %v1604 = vadd.f32 0.0, %v1603
      %1605 = vmatprep.mubr.bf16.mxu0 %v1120
      %1606 = vmatmul.mubr.bf16.gmra.mrb[0].mxu0 %v1119
      %v1607 = vpop.f32.mrb[0].mxu0
      %v1608 = vadd.f32 0.0, %v1607
      %v1609 = vpop.f32.mrb[0].mxu0
      %v1610 = vadd.f32 0.0, %v1609
      %v1611 = vpop.f32.mrb[0].mxu0
      %v1612 = vadd.f32 0.0, %v1611
      %v1613 = vpop.f32.mrb[0].mxu0
      %v1614 = vadd.f32 0.0, %v1613
      %1615 = vmatprep.mubr.bf16.mxu0 %v1124
      %1616 = vmatmul.mubr.bf16.gmra.mrb[0].mxu0 %v1123
      %v1617 = vpop.f32.mrb[0].mxu0
      %v1618 = vadd.f32 0.0, %v1617
      %v1619 = vpop.f32.mrb[0].mxu0
      %v1620 = vadd.f32 0.0, %v1619
      %v1621 = vpop.f32.mrb[0].mxu0
      %v1622 = vadd.f32 0.0, %v1621
      %v1623 = vpop.f32.mrb[0].mxu0
      %v1624 = vadd.f32 0.0, %v1623
      %1625 = vmatprep.mubr.bf16.mxu0 %v1128
      %1626 = vmatmul.mubr.bf16.gmra.mrb[0].mxu0 %v1127
      %v1627 = vpop.f32.mrb[0].mxu0
      %v1628 = vadd.f32 0.0, %v1627
      %v1629 = vpop.f32.mrb[0].mxu0
      %v1630 = vadd.f32 0.0, %v1629
      %v1631 = vpop.f32.mrb[0].mxu0
      %v1632 = vadd.f32 0.0, %v1631
      %v1633 = vpop.f32.mrb[0].mxu0
      %v1634 = vadd.f32 0.0, %v1633
      %1635 = vmatprep.mubr.bf16.mxu0 %v1132
      %1636 = vmatmul.mubr.bf16.gmra.mrb[0].mxu0 %v1131
      %v1637 = vpop.f32.mrb[0].mxu0
      %v1638 = vadd.f32 0.0, %v1637
      %v1639 = vpop.f32.mrb[0].mxu0
      %v1640 = vadd.f32 0.0, %v1639
      %v1641 = vpop.f32.mrb[0].mxu0
      %v1642 = vadd.f32 0.0, %v1641
      %v1643 = vpop.f32.mrb[0].mxu0
      %v1644 = vadd.f32 0.0, %v1643
      %1645 = vmatprep.mubr.bf16.mxu0 %v1136
      %1646 = vmatmul.mubr.bf16.gmra.mrb[0].mxu0 %v1135
      %v1647 = vpop.f32.mrb[0].mxu0
      %v1648 = vadd.f32 0.0, %v1647
      %v1649 = vpop.f32.mrb[0].mxu0
      %v1650 = vadd.f32 0.0, %v1649
      %v1651 = vpop.f32.mrb[0].mxu0
      %v1652 = vadd.f32 0.0, %v1651
      %v1653 = vpop.f32.mrb[0].mxu0
      %v1654 = vadd.f32 0.0, %v1653
      %1655 = vmatprep.mubr.bf16.mxu0 %v1140
      %1656 = vmatmul.mubr.bf16.gmra.mrb[0].mxu0 %v1139
      %v1657 = vpop.f32.mrb[0].mxu0
      %v1658 = vadd.f32 0.0, %v1657
      %v1659 = vpop.f32.mrb[0].mxu0
      %v1660 = vadd.f32 0.0, %v1659
      %v1661 = vpop.f32.mrb[0].mxu0
      %v1662 = vadd.f32 0.0, %v1661
      %v1663 = vpop.f32.mrb[0].mxu0
      %v1664 = vadd.f32 0.0, %v1663
      %1665 = vmatprep.mubr.bf16.mxu0 %v1144
      %1666 = vmatmul.mubr.bf16.gmra.mrb[0].mxu0 %v1143
      %v1667 = vpop.f32.mrb[0].mxu0
      %v1668 = vadd.f32 0.0, %v1667
      %v1669 = vpop.f32.mrb[0].mxu0
      %v1670 = vadd.f32 0.0, %v1669
      %v1671 = vpop.f32.mrb[0].mxu0
      %v1672 = vadd.f32 0.0, %v1671
      %v1673 = vpop.f32.mrb[0].mxu0
      %v1674 = vadd.f32 0.0, %v1673
      %1675 = vmatprep.mubr.bf16.mxu0 %v1148
      %1676 = vmatmul.mubr.bf16.gmra.mrb[0].mxu0 %v1147
      %v1677 = vpop.f32.mrb[0].mxu0
      %v1678 = vadd.f32 0.0, %v1677
      %v1679 = vpop.f32.mrb[0].mxu0
      %v1680 = vadd.f32 0.0, %v1679
      %v1681 = vpop.f32.mrb[0].mxu0
      %v1682 = vadd.f32 0.0, %v1681
      %v1683 = vpop.f32.mrb[0].mxu0
      %v1684 = vadd.f32 0.0, %v1683
      %1685 = vmatprep.mubr.bf16.mxu0 %v1152
      %1686 = vmatmul.mubr.bf16.gmra.mrb[0].mxu0 %v1151
      %v1687 = vpop.f32.mrb[0].mxu0
      %v1688 = vadd.f32 0.0, %v1687
      %v1689 = vpop.f32.mrb[0].mxu0
      %v1690 = vadd.f32 0.0, %v1689
      %v1691 = vpop.f32.mrb[0].mxu0
      %v1692 = vadd.f32 0.0, %v1691
      %v1693 = vpop.f32.mrb[0].mxu0
      %v1694 = vadd.f32 0.0, %v1693
      %1695 = vmatprep.mubr.bf16.mxu0 %v1156
      %1696 = vmatmul.mubr.bf16.gmra.mrb[0].mxu0 %v1155
      %v1697 = vpop.f32.mrb[0].mxu0
      %v1698 = vadd.f32 0.0, %v1697
      %v1699 = vpop.f32.mrb[0].mxu0
      %v1700 = vadd.f32 0.0, %v1699
      %v1701 = vpop.f32.mrb[0].mxu0
      %v1702 = vadd.f32 0.0, %v1701
      %v1703 = vpop.f32.mrb[0].mxu0
      %v1704 = vadd.f32 0.0, %v1703
      %1705 = vmatprep.mubr.bf16.mxu0 %v1160
      %1706 = vmatmul.mubr.bf16.gmra.mrb[0].mxu0 %v1159
      %v1707 = vpop.f32.mrb[0].mxu0
      %v1708 = vadd.f32 0.0, %v1707
      %v1709 = vpop.f32.mrb[0].mxu0
      %v1710 = vadd.f32 0.0, %v1709
      %v1711 = vpop.f32.mrb[0].mxu0
      %v1712 = vadd.f32 0.0, %v1711
      %v1713 = vpop.f32.mrb[0].mxu0
      %v1714 = vadd.f32 0.0, %v1713
      %1715 = vmatprep.mubr.bf16.mxu0 %v1164
      %1716 = vmatmul.mubr.bf16.gmra.mrb[0].mxu0 %v1163
      %v1717 = vpop.f32.mrb[0].mxu0
      %v1718 = vadd.f32 0.0, %v1717
      %v1719 = vpop.f32.mrb[0].mxu0
      %v1720 = vadd.f32 0.0, %v1719
      %v1721 = vpop.f32.mrb[0].mxu0
      %v1722 = vadd.f32 0.0, %v1721
      %v1723 = vpop.f32.mrb[0].mxu0
      %v1724 = vadd.f32 0.0, %v1723
      %1725 = vmatprep.mubr.bf16.mxu0 %v1168
      %1726 = vmatmul.mubr.bf16.gmra.mrb[0].mxu0 %v1167
      %v1727 = vpop.f32.mrb[0].mxu0
      %v1728 = vadd.f32 0.0, %v1727
      %v1729 = vpop.f32.mrb[0].mxu0
      %v1730 = vadd.f32 0.0, %v1729
      %v1731 = vpop.f32.mrb[0].mxu0
      %v1732 = vadd.f32 0.0, %v1731
      %v1733 = vpop.f32.mrb[0].mxu0
      %v1734 = vadd.f32 0.0, %v1733
      %1735 = vmatprep.mubr.bf16.mxu0 %v1172
      %1736 = vmatmul.mubr.bf16.gmra.mrb[0].mxu0 %v1171
      %v1737 = vpop.f32.mrb[0].mxu0
      %v1738 = vadd.f32 0.0, %v1737
      %v1739 = vpop.f32.mrb[0].mxu0
      %v1740 = vadd.f32 0.0, %v1739
      %v1741 = vpop.f32.mrb[0].mxu0
      %v1742 = vadd.f32 0.0, %v1741
      %v1743 = vpop.f32.mrb[0].mxu0
      %v1744 = vadd.f32 0.0, %v1743
      %1745 = vmatprep.mubr.bf16.mxu0 %v1176
      %1746 = vmatmul.mubr.bf16.gmra.mrb[0].mxu0 %v1175
      %v1747 = vpop.f32.mrb[0].mxu0
      %v1748 = vadd.f32 0.0, %v1747
      %v1749 = vpop.f32.mrb[0].mxu0
      %v1750 = vadd.f32 0.0, %v1749
      %v1751 = vpop.f32.mrb[0].mxu0
      %v1752 = vadd.f32 0.0, %v1751
      %v1753 = vpop.f32.mrb[0].mxu0
      %v1754 = vadd.f32 0.0, %v1753
      %1755 = vdwg.mxu0
      %1756 = vmatprep.subr.bf16.mxu0 %v1468
      %1757 = vmatpush1.bf16.msra.mxu0 %v1467
      %1758 = vmatprep.subr.bf16.mxu0 %v1470
      %1759 = vmatpush1.bf16.msra.mxu0 %v1469
      %1760 = vmatprep.subr.bf16.mxu0 %v1472
      %1761 = vmatpush1.bf16.msra.mxu0 %v1471
      %1762 = vmatprep.subr.bf16.mxu0 %v1474
      %1763 = vmatpush1.bf16.msra.mxu0 %v1473
      %1764 = vmatprep.subr.bf16.mxu0 %v1476
      %1765 = vmatpush1.bf16.msra.mxu0 %v1475
      %1766 = vmatprep.subr.bf16.mxu0 %v1478
      %1767 = vmatpush1.bf16.msra.mxu0 %v1477
      %1768 = vmatprep.subr.bf16.mxu0 %v1480
      %1769 = vmatpush1.bf16.msra.mxu0 %v1479
      %1770 = vmatprep.subr.bf16.mxu0 %v1482
      %1771 = vmatpush1.bf16.msra.mxu0 %v1481
      %1772 = vmatprep.subr.bf16.mxu0 %v1484
      %1773 = vmatpush1.bf16.msra.mxu0 %v1483
      %1774 = vmatprep.subr.bf16.mxu0 %v1486
      %1775 = vmatpush1.bf16.msra.mxu0 %v1485
      %1776 = vmatprep.subr.bf16.mxu0 %v1488
      %1777 = vmatpush1.bf16.msra.mxu0 %v1487
      %1778 = vmatprep.subr.bf16.mxu0 %v1490
      %1779 = vmatpush1.bf16.msra.mxu0 %v1489
      %1780 = vmatprep.subr.bf16.mxu0 %v1492
      %1781 = vmatpush1.bf16.msra.mxu0 %v1491
      %1782 = vmatprep.subr.bf16.mxu0 %v1494
      %1783 = vmatpush1.bf16.msra.mxu0 %v1493
      %1784 = vmatprep.subr.bf16.mxu0 %v1496
      %1785 = vmatpush1.bf16.msra.mxu0 %v1495
      %1786 = vmatprep.subr.bf16.mxu0 %v1498
      %1787 = vmatpush1.bf16.msra.mxu0 %v1497
      %1788 = vmatprep.mubr.bf16.mxu0 %v1118
      %1789 = vmatmul.mubr.bf16.gmra.mrb[0].mxu0 %v1117
      %v1790 = vpop.f32.mrb[0].mxu0
      %v1791 = vadd.f32 %v1598, %v1790
      %v1792 = vpop.f32.mrb[0].mxu0
      %v1793 = vadd.f32 %v1600, %v1792
      %v1794 = vpop.f32.mrb[0].mxu0
      %v1795 = vadd.f32 %v1602, %v1794
      %v1796 = vpop.f32.mrb[0].mxu0
      %v1797 = vadd.f32 %v1604, %v1796
      %1798 = vmatprep.mubr.bf16.mxu0 %v1122
      %1799 = vmatmul.mubr.bf16.gmra.mrb[0].mxu0 %v1121
      %v1800 = vpop.f32.mrb[0].mxu0
      %v1801 = vadd.f32 %v1608, %v1800
      %v1802 = vpop.f32.mrb[0].mxu0
      %v1803 = vadd.f32 %v1610, %v1802
      %v1804 = vpop.f32.mrb[0].mxu0
      %v1805 = vadd.f32 %v1612, %v1804
      %v1806 = vpop.f32.mrb[0].mxu0
      %v1807 = vadd.f32 %v1614, %v1806
      %1808 = vmatprep.mubr.bf16.mxu0 %v1126
      %1809 = vmatmul.mubr.bf16.gmra.mrb[0].mxu0 %v1125
      %v1810 = vpop.f32.mrb[0].mxu0
      %v1811 = vadd.f32 %v1618, %v1810
      %v1812 = vpop.f32.mrb[0].mxu0
      %v1813 = vadd.f32 %v1620, %v1812
      %v1814 = vpop.f32.mrb[0].mxu0
      %v1815 = vadd.f32 %v1622, %v1814
      %v1816 = vpop.f32.mrb[0].mxu0
      %v1817 = vadd.f32 %v1624, %v1816
      %1818 = vmatprep.mubr.bf16.mxu0 %v1130
      %1819 = vmatmul.mubr.bf16.gmra.mrb[0].mxu0 %v1129
      %v1820 = vpop.f32.mrb[0].mxu0
      %v1821 = vadd.f32 %v1628, %v1820
      %v1822 = vpop.f32.mrb[0].mxu0
      %v1823 = vadd.f32 %v1630, %v1822
      %v1824 = vpop.f32.mrb[0].mxu0
      %v1825 = vadd.f32 %v1632, %v1824
      %v1826 = vpop.f32.mrb[0].mxu0
      %v1827 = vadd.f32 %v1634, %v1826
      %1828 = vmatprep.mubr.bf16.mxu0 %v1134
      %1829 = vmatmul.mubr.bf16.gmra.mrb[0].mxu0 %v1133
      %v1830 = vpop.f32.mrb[0].mxu0
      %v1831 = vadd.f32 %v1638, %v1830
      %v1832 = vpop.f32.mrb[0].mxu0
      %v1833 = vadd.f32 %v1640, %v1832
      %v1834 = vpop.f32.mrb[0].mxu0
      %v1835 = vadd.f32 %v1642, %v1834
      %v1836 = vpop.f32.mrb[0].mxu0
      %v1837 = vadd.f32 %v1644, %v1836
      %1838 = vmatprep.mubr.bf16.mxu0 %v1138
      %1839 = vmatmul.mubr.bf16.gmra.mrb[0].mxu0 %v1137
      %v1840 = vpop.f32.mrb[0].mxu0
      %v1841 = vadd.f32 %v1648, %v1840
      %v1842 = vpop.f32.mrb[0].mxu0
      %v1843 = vadd.f32 %v1650, %v1842
      %v1844 = vpop.f32.mrb[0].mxu0
      %v1845 = vadd.f32 %v1652, %v1844
      %v1846 = vpop.f32.mrb[0].mxu0
      %v1847 = vadd.f32 %v1654, %v1846
      %1848 = vmatprep.mubr.bf16.mxu0 %v1142
      %1849 = vmatmul.mubr.bf16.gmra.mrb[0].mxu0 %v1141
      %v1850 = vpop.f32.mrb[0].mxu0
      %v1851 = vadd.f32 %v1658, %v1850
      %v1852 = vpop.f32.mrb[0].mxu0
      %v1853 = vadd.f32 %v1660, %v1852
      %v1854 = vpop.f32.mrb[0].mxu0
      %v1855 = vadd.f32 %v1662, %v1854
      %v1856 = vpop.f32.mrb[0].mxu0
      %v1857 = vadd.f32 %v1664, %v1856
      %1858 = vmatprep.mubr.bf16.mxu0 %v1146
      %1859 = vmatmul.mubr.bf16.gmra.mrb[0].mxu0 %v1145
      %v1860 = vpop.f32.mrb[0].mxu0
      %v1861 = vadd.f32 %v1668, %v1860
      %v1862 = vpop.f32.mrb[0].mxu0
      %v1863 = vadd.f32 %v1670, %v1862
      %v1864 = vpop.f32.mrb[0].mxu0
      %v1865 = vadd.f32 %v1672, %v1864
      %v1866 = vpop.f32.mrb[0].mxu0
      %v1867 = vadd.f32 %v1674, %v1866
      %1868 = vmatprep.mubr.bf16.mxu0 %v1150
      %1869 = vmatmul.mubr.bf16.gmra.mrb[0].mxu0 %v1149
      %v1870 = vpop.f32.mrb[0].mxu0
      %v1871 = vadd.f32 %v1678, %v1870
      %v1872 = vpop.f32.mrb[0].mxu0
      %v1873 = vadd.f32 %v1680, %v1872
      %v1874 = vpop.f32.mrb[0].mxu0
      %v1875 = vadd.f32 %v1682, %v1874
      %v1876 = vpop.f32.mrb[0].mxu0
      %v1877 = vadd.f32 %v1684, %v1876
      %1878 = vmatprep.mubr.bf16.mxu0 %v1154
      %1879 = vmatmul.mubr.bf16.gmra.mrb[0].mxu0 %v1153
      %v1880 = vpop.f32.mrb[0].mxu0
      %v1881 = vadd.f32 %v1688, %v1880
      %v1882 = vpop.f32.mrb[0].mxu0
      %v1883 = vadd.f32 %v1690, %v1882
      %v1884 = vpop.f32.mrb[0].mxu0
      %v1885 = vadd.f32 %v1692, %v1884
      %v1886 = vpop.f32.mrb[0].mxu0
      %v1887 = vadd.f32 %v1694, %v1886
      %1888 = vmatprep.mubr.bf16.mxu0 %v1158
      %1889 = vmatmul.mubr.bf16.gmra.mrb[0].mxu0 %v1157
      %v1890 = vpop.f32.mrb[0].mxu0
      %v1891 = vadd.f32 %v1698, %v1890
      %v1892 = vpop.f32.mrb[0].mxu0
      %v1893 = vadd.f32 %v1700, %v1892
      %v1894 = vpop.f32.mrb[0].mxu0
      %v1895 = vadd.f32 %v1702, %v1894
      %v1896 = vpop.f32.mrb[0].mxu0
      %v1897 = vadd.f32 %v1704, %v1896
      %1898 = vmatprep.mubr.bf16.mxu0 %v1162
      %1899 = vmatmul.mubr.bf16.gmra.mrb[0].mxu0 %v1161
      %v1900 = vpop.f32.mrb[0].mxu0
      %v1901 = vadd.f32 %v1708, %v1900
      %v1902 = vpop.f32.mrb[0].mxu0
      %v1903 = vadd.f32 %v1710, %v1902
      %v1904 = vpop.f32.mrb[0].mxu0
      %v1905 = vadd.f32 %v1712, %v1904
      %v1906 = vpop.f32.mrb[0].mxu0
      %v1907 = vadd.f32 %v1714, %v1906
      %1908 = vmatprep.mubr.bf16.mxu0 %v1166
      %1909 = vmatmul.mubr.bf16.gmra.mrb[0].mxu0 %v1165
      %v1910 = vpop.f32.mrb[0].mxu0
      %v1911 = vadd.f32 %v1718, %v1910
      %v1912 = vpop.f32.mrb[0].mxu0
      %v1913 = vadd.f32 %v1720, %v1912
      %v1914 = vpop.f32.mrb[0].mxu0
      %v1915 = vadd.f32 %v1722, %v1914
      %v1916 = vpop.f32.mrb[0].mxu0
      %v1917 = vadd.f32 %v1724, %v1916
      %1918 = vmatprep.mubr.bf16.mxu0 %v1170
      %1919 = vmatmul.mubr.bf16.gmra.mrb[0].mxu0 %v1169
      %v1920 = vpop.f32.mrb[0].mxu0
      %v1921 = vadd.f32 %v1728, %v1920
      %v1922 = vpop.f32.mrb[0].mxu0
      %v1923 = vadd.f32 %v1730, %v1922
      %v1924 = vpop.f32.mrb[0].mxu0
      %v1925 = vadd.f32 %v1732, %v1924
      %v1926 = vpop.f32.mrb[0].mxu0
      %v1927 = vadd.f32 %v1734, %v1926
      %1928 = vmatprep.mubr.bf16.mxu0 %v1174
      %1929 = vmatmul.mubr.bf16.gmra.mrb[0].mxu0 %v1173
      %v1930 = vpop.f32.mrb[0].mxu0
      %v1931 = vadd.f32 %v1738, %v1930
      %v1932 = vpop.f32.mrb[0].mxu0
      %v1933 = vadd.f32 %v1740, %v1932
      %v1934 = vpop.f32.mrb[0].mxu0
      %v1935 = vadd.f32 %v1742, %v1934
      %v1936 = vpop.f32.mrb[0].mxu0
      %v1937 = vadd.f32 %v1744, %v1936
      %1938 = vmatprep.mubr.bf16.mxu0 %v1178
      %1939 = vmatmul.mubr.bf16.gmra.mrb[0].mxu0 %v1177
      %v1940 = vpop.f32.mrb[0].mxu0
      %v1941 = vadd.f32 %v1748, %v1940
      %v1942 = vpop.f32.mrb[0].mxu0
      %v1943 = vadd.f32 %v1750, %v1942
      %v1944 = vpop.f32.mrb[0].mxu0
      %v1945 = vadd.f32 %v1752, %v1944
      %v1946 = vpop.f32.mrb[0].mxu0
      %v1947 = vadd.f32 %v1754, %v1946
      %1948 = vdwg.mxu0
      %v1950 = vlaneseq
      %v1951 = vshrl.u32 %v1950, 7
      %v1952 = vsub.s32 0, %v1951
      %v1953 = vrot.slane %v1114, %v1952
      %v1954 = vlaneseq
      %v1955 = vshrl.u32 %v1954, 7
      %v1956 = vsub.s32 1, %v1955
      %v1957 = vrot.slane %v1114, %v1956
      %v1960 = vadd.f32 %v1953, %v1791
      %v1961 = vadd.f32 %v1957, %v1793
      %v1962 = vadd.f32 %v1953, %v1795
      %v1963 = vadd.f32 %v1957, %v1797
      %v1964 = vadd.f32 %v1953, %v1801
      %v1965 = vadd.f32 %v1957, %v1803
      %v1966 = vadd.f32 %v1953, %v1805
      %v1967 = vadd.f32 %v1957, %v1807
      %v1968 = vadd.f32 %v1953, %v1811
      %v1969 = vadd.f32 %v1957, %v1813
      %v1970 = vadd.f32 %v1953, %v1815
      %v1971 = vadd.f32 %v1957, %v1817
      %v1972 = vadd.f32 %v1953, %v1821
      %v1973 = vadd.f32 %v1957, %v1823
      %v1974 = vadd.f32 %v1953, %v1825
      %v1975 = vadd.f32 %v1957, %v1827
      %v1976 = vadd.f32 %v1953, %v1831
      %v1977 = vadd.f32 %v1957, %v1833
      %v1978 = vadd.f32 %v1953, %v1835
      %v1979 = vadd.f32 %v1957, %v1837
      %v1980 = vadd.f32 %v1953, %v1841
      %v1981 = vadd.f32 %v1957, %v1843
      %v1982 = vadd.f32 %v1953, %v1845
      %v1983 = vadd.f32 %v1957, %v1847
      %v1984 = vadd.f32 %v1953, %v1851
      %v1985 = vadd.f32 %v1957, %v1853
      %v1986 = vadd.f32 %v1953, %v1855
      %v1987 = vadd.f32 %v1957, %v1857
      %v1988 = vadd.f32 %v1953, %v1861
      %v1989 = vadd.f32 %v1957, %v1863
      %v1990 = vadd.f32 %v1953, %v1865
      %v1991 = vadd.f32 %v1957, %v1867
      %v1992 = vadd.f32 %v1953, %v1871
      %v1993 = vadd.f32 %v1957, %v1873
      %v1994 = vadd.f32 %v1953, %v1875
      %v1995 = vadd.f32 %v1957, %v1877
      %v1996 = vadd.f32 %v1953, %v1881
      %v1997 = vadd.f32 %v1957, %v1883
      %v1998 = vadd.f32 %v1953, %v1885
      %v1999 = vadd.f32 %v1957, %v1887
      %v2000 = vadd.f32 %v1953, %v1891
      %v2001 = vadd.f32 %v1957, %v1893
      %v2002 = vadd.f32 %v1953, %v1895
      %v2003 = vadd.f32 %v1957, %v1897
      %v2004 = vadd.f32 %v1953, %v1901
      %v2005 = vadd.f32 %v1957, %v1903
      %v2006 = vadd.f32 %v1953, %v1905
      %v2007 = vadd.f32 %v1957, %v1907
      %v2008 = vadd.f32 %v1953, %v1911
      %v2009 = vadd.f32 %v1957, %v1913
      %v2010 = vadd.f32 %v1953, %v1915
      %v2011 = vadd.f32 %v1957, %v1917
      %v2012 = vadd.f32 %v1953, %v1921
      %v2013 = vadd.f32 %v1957, %v1923
      %v2014 = vadd.f32 %v1953, %v1925
      %v2015 = vadd.f32 %v1957, %v1927
      %v2016 = vadd.f32 %v1953, %v1931
      %v2017 = vadd.f32 %v1957, %v1933
      %v2018 = vadd.f32 %v1953, %v1935
      %v2019 = vadd.f32 %v1957, %v1937
      %v2020 = vadd.f32 %v1953, %v1941
      %v2021 = vadd.f32 %v1957, %v1943
      %v2022 = vadd.f32 %v1953, %v1945
      %v2023 = vadd.f32 %v1957, %v1947
      %2024 = vst [vmem:[%s294] sm:$0xff] %v1960
      %2025 = vst [vmem:[%s294 + $0x8] sm:$0xff] %v1961
      %2026 = vst [vmem:[%s294 + $0x10] sm:$0xff] %v1962
      %2027 = vst [vmem:[%s294 + $0x18] sm:$0xff] %v1963
      %2028 = vst [vmem:[%s294 + $0x20] sm:$0xff] %v1964
      %2029 = vst [vmem:[%s294 + $0x28] sm:$0xff] %v1965
      %2030 = vst [vmem:[%s294 + $0x30] sm:$0xff] %v1966
      %2031 = vst [vmem:[%s294 + $0x38] sm:$0xff] %v1967
      %2032 = vst [vmem:[%s294 + $0x40] sm:$0xff] %v1968
      %2033 = vst [vmem:[%s294 + $0x48] sm:$0xff] %v1969
      %2034 = vst [vmem:[%s294 + $0x50] sm:$0xff] %v1970
      %2035 = vst [vmem:[%s294 + $0x58] sm:$0xff] %v1971
      %2036 = vst [vmem:[%s294 + $0x60] sm:$0xff] %v1972
      %2037 = vst [vmem:[%s294 + $0x68] sm:$0xff] %v1973
      %2038 = vst [vmem:[%s294 + $0x70] sm:$0xff] %v1974
      %2039 = vst [vmem:[%s294 + $0x78] sm:$0xff] %v1975
      %2040 = vst [vmem:[%s294 + $0x80] sm:$0xff] %v1976
      %2041 = vst [vmem:[%s294 + $0x88] sm:$0xff] %v1977
      %2042 = vst [vmem:[%s294 + $0x90] sm:$0xff] %v1978
      %2043 = vst [vmem:[%s294 + $0x98] sm:$0xff] %v1979
      %2044 = vst [vmem:[%s294 + $0xa0] sm:$0xff] %v1980
      %2045 = vst [vmem:[%s294 + $0xa8] sm:$0xff] %v1981
      %2046 = vst [vmem:[%s294 + $0xb0] sm:$0xff] %v1982
      %2047 = vst [vmem:[%s294 + $0xb8] sm:$0xff] %v1983
      %2048 = vst [vmem:[%s294 + $0xc0] sm:$0xff] %v1984
      %2049 = vst [vmem:[%s294 + $0xc8] sm:$0xff] %v1985
      %2050 = vst [vmem:[%s294 + $0xd0] sm:$0xff] %v1986
      %2051 = vst [vmem:[%s294 + $0xd8] sm:$0xff] %v1987
      %2052 = vst [vmem:[%s294 + $0xe0] sm:$0xff] %v1988
      %2053 = vst [vmem:[%s294 + $0xe8] sm:$0xff] %v1989
      %2054 = vst [vmem:[%s294 + $0xf0] sm:$0xff] %v1990
      %2055 = vst [vmem:[%s294 + $0xf8] sm:$0xff] %v1991
      %2056 = vst [vmem:[%s294 + $0x100] sm:$0xff] %v1992
      %2057 = vst [vmem:[%s294 + $0x108] sm:$0xff] %v1993
      %2058 = vst [vmem:[%s294 + $0x110] sm:$0xff] %v1994
      %2059 = vst [vmem:[%s294 + $0x118] sm:$0xff] %v1995
      %2060 = vst [vmem:[%s294 + $0x120] sm:$0xff] %v1996
      %2061 = vst [vmem:[%s294 + $0x128] sm:$0xff] %v1997
      %2062 = vst [vmem:[%s294 + $0x130] sm:$0xff] %v1998
      %2063 = vst [vmem:[%s294 + $0x138] sm:$0xff] %v1999
      %2064 = vst [vmem:[%s294 + $0x140] sm:$0xff] %v2000
      %2065 = vst [vmem:[%s294 + $0x148] sm:$0xff] %v2001
      %2066 = vst [vmem:[%s294 + $0x150] sm:$0xff] %v2002
      %2067 = vst [vmem:[%s294 + $0x158] sm:$0xff] %v2003
      %2068 = vst [vmem:[%s294 + $0x160] sm:$0xff] %v2004
      %2069 = vst [vmem:[%s294 + $0x168] sm:$0xff] %v2005
      %2070 = vst [vmem:[%s294 + $0x170] sm:$0xff] %v2006
      %2071 = vst [vmem:[%s294 + $0x178] sm:$0xff] %v2007
      %2072 = vst [vmem:[%s294 + $0x180] sm:$0xff] %v2008
      %2073 = vst [vmem:[%s294 + $0x188] sm:$0xff] %v2009
      %2074 = vst [vmem:[%s294 + $0x190] sm:$0xff] %v2010
      %2075 = vst [vmem:[%s294 + $0x198] sm:$0xff] %v2011
      %2076 = vst [vmem:[%s294 + $0x1a0] sm:$0xff] %v2012
      %2077 = vst [vmem:[%s294 + $0x1a8] sm:$0xff] %v2013
      %2078 = vst [vmem:[%s294 + $0x1b0] sm:$0xff] %v2014
      %2079 = vst [vmem:[%s294 + $0x1b8] sm:$0xff] %v2015
      %2080 = vst [vmem:[%s294 + $0x1c0] sm:$0xff] %v2016
      %2081 = vst [vmem:[%s294 + $0x1c8] sm:$0xff] %v2017
      %2082 = vst [vmem:[%s294 + $0x1d0] sm:$0xff] %v2018
      %2083 = vst [vmem:[%s294 + $0x1d8] sm:$0xff] %v2019
      %2084 = vst [vmem:[%s294 + $0x1e0] sm:$0xff] %v2020
      %2085 = vst [vmem:[%s294 + $0x1e8] sm:$0xff] %v2021
      %2086 = vst [vmem:[%s294 + $0x1f0] sm:$0xff] %v2022
      %2087 = vst [vmem:[%s294 + $0x1f8] sm:$0xff] %v2023
      %s2088 = smul.u32 32, %s20
      %s2089 = smul.u32 2, %s21
      %p2090 = scmp.lt.s32.totalorder %s2088, 63
      %s2091 = scalar_select %p2090, %s2088, 63
      %p2092 = scmp.lt.s32.totalorder %s2089, 1
      %s2093 = scalar_select %p2092, %s2089, 1
      %s2094 = smul.addr %s2091, 2
      %s2095 = sadd.s32 %s2093, %s2094
      %s2096 = smul.addr %s2095, 8
      %s2097 = scalar_lea.vmem %s5, %s2096
      // Predicated region
      $region45: #{nnlm_forward.1} parent=39 // pred_check
        %p2098 = pneg %p168
      $region46: #{nnlm_forward.1} parent=39 // pred_check_branch
        %2100 = sbr.rel (%p2098) target = $region48
      $region47: #{nnlm_forward.1} parent=39 // pred_region
        %s2101 = smul.u32 32, %s20
        %s2102 = smul.u32 2, %s21
      $region48: #{nnlm_forward.1} parent=39 // pred_fallthru
        _
    $region40: #{nnlm_forward.1} parent=5 // pred_fallthru
      _
    %p2103 = scmp.le.s32.totalorder 2, %s11
    // Predicated region
    $region49: #{nnlm_forward.1} parent=5 // pred_check
      %p2104 = pneg %p2103
    $region50: #{nnlm_forward.1} parent=5 // pred_check_branch
      %2106 = sbr.rel (%p2104) target = $region52
    $region51: #{nnlm_forward.1} parent=5 // pred_region
      %s2107 = ssub.s32 %s11, 2
      // Predicated region
      $region53: #{nnlm_forward.1} parent=51 // pred_check
        %p2108 = pneg %p174
      $region54: #{nnlm_forward.1} parent=51 // pred_check_branch
        %2110 = sbr.rel (%p2108) target = $region56
      $region55: #{nnlm_forward.1} parent=51 // pred_region
        %s2111 = smul.u32 32, %s22
        %s2112 = smul.u32 2, %s23
        %p2113 = scmp.lt.s32.totalorder %s2111, 63
        %s2114 = scalar_select %p2113, %s2111, 63
        %p2115 = scmp.lt.s32.totalorder %s2112, 1
        %s2116 = scalar_select %p2115, %s2112, 1
        %s2117 = smul.addr %s2114, 2
        %s2118 = sadd.s32 %s2116, %s2117
        %s2119 = smul.addr %s2118, 8
        %s2120 = scalar_lea.vmem %s5, %s2119
      $region56: #{nnlm_forward.1} parent=51 // pred_fallthru
        _
    $region52: #{nnlm_forward.1} parent=5 // pred_fallthru
      _
  $region6: #{nnlm_forward.1} parent=0 // loop_footer
    %s15 = sadd.s32 1, %s11
  $region7: #{nnlm_forward.1} parent=0 // loop_footer_branch
    %10 = sbr.rel target = $region3
  $region8: #{nnlm_forward.1} parent=0 // loop_exit
    _

</llo_original>
